<compile_context>
chip_gen: v7x
topology: tpu7x:2x2x1
jax: 0.10.0
libtpu: 0.0.40
codegen_flags: <defaults>
</compile_context>

<pallas_src>
import functools
import math

import jax
import jax.numpy as jnp
from jax.experimental import pallas as pl
from jax.experimental.pallas import tpu as pltpu


# ----------------------------------------------------------------------------
# Fused MHA kernel: one grid step handles one batch row end-to-end.
#   q/k/v refs : (1, S, D)
#   w_ref      : (4, D, D)  = [Wq^T, Wk^T, Wv^T, Wo^T]
#   b_ref      : (4, 1, D)  = [bq, bk, bv, bo]
#   o_ref      : (1, S, D)
# ----------------------------------------------------------------------------
def _mha_kernel(q_ref, k_ref, v_ref, w_ref, b_ref, o_ref, *, heads, d_k, scale):
    x_q = q_ref[0]                      # (S, D)
    x_k = k_ref[0]
    x_v = v_ref[0]

    # Q/K/V projections (single kernel, three MXU passes).
    qp = jnp.dot(x_q, w_ref[0], preferred_element_type=jnp.float32) + b_ref[0]
    kp = jnp.dot(x_k, w_ref[1], preferred_element_type=jnp.float32) + b_ref[1]
    vp = jnp.dot(x_v, w_ref[2], preferred_element_type=jnp.float32) + b_ref[2]

    # Scale Q once (S*D multiplies) instead of the S*S score matrix per head.
    qp = qp * scale

    # Per-head attention; static unrolled loop, static lane slices (no
    # reshape/transpose of the head axis needed).
    head_outs = []
    for h in range(heads):
        sl = slice(h * d_k, (h + 1) * d_k)
        qh = qp[:, sl]                  # (S, d_k)
        kh = kp[:, sl]
        vh = vp[:, sl]
        # Contract last dims of both operands -> no materialized K^T.
        s = jax.lax.dot_general(
            qh, kh, (((1,), (1,)), ((), ())),
            preferred_element_type=jnp.float32,
        )                               # (S, S)
        m = jnp.max(s, axis=-1, keepdims=True)
        e = jnp.exp(s - m)
        denom = jnp.sum(e, axis=-1, keepdims=True)
        # approx=True would move the divide to the EUP (free slot) at ~2^-12
        # relative error; keep exact here to hold the 1e-4 check tolerance.
        p = e * pl.reciprocal(denom, approx=False)
        head_outs.append(jnp.dot(p, vh, preferred_element_type=jnp.float32))

    concat = jnp.concatenate(head_outs, axis=-1)      # (S, D)
    out = jnp.dot(concat, w_ref[3], preferred_element_type=jnp.float32) + b_ref[3]
    o_ref[0] = out


def multihead_attention(q, k, v, params, heads):
    """q, k, v: (bs, seq, d_model) float32.  Returns (bs, seq, d_model)."""
    bs, seq, d_model = q.shape
    d_k = d_model // heads

    # Pre-transpose + stack weights once (PyTorch stores (d_out, d_in)).
    w_all = jnp.stack(
        [params["wq"].T, params["wk"].T, params["wv"].T, params["wo"].T]
    )                                                   # (4, D, D)
    b_all = jnp.stack(
        [params["bq"], params["bk"], params["bv"], params["bo"]]
    )[:, None, :]                                       # (4, 1, D)

    kernel = functools.partial(
        _mha_kernel, heads=heads, d_k=d_k, scale=1.0 / math.sqrt(d_k)
    )

    return pl.pallas_call(
        kernel,
        out_shape=jax.ShapeDtypeStruct((bs, seq, d_model), jnp.float32),
        grid=(bs,),
        in_specs=[
            pl.BlockSpec((1, seq, d_model), lambda b: (b, 0, 0)),
            pl.BlockSpec((1, seq, d_model), lambda b: (b, 0, 0)),
            pl.BlockSpec((1, seq, d_model), lambda b: (b, 0, 0)),
            pl.BlockSpec((4, d_model, d_model), lambda b: (0, 0, 0)),
            pl.BlockSpec((4, 1, d_model), lambda b: (0, 0, 0)),
        ],
        out_specs=pl.BlockSpec((1, seq, d_model), lambda b: (b, 0, 0)),
        compiler_params=pltpu.CompilerParams(
            dimension_semantics=("parallel",)
        ),
    )(q, k, v, w_all, b_all)


# ----------------------------------------------------------------------------
# Pure-JAX reference for a silent correctness check
# ----------------------------------------------------------------------------
def _reference(q, k, v, params, heads):
    bs, seq, d_model = q.shape
    d_k = d_model // heads

    def lin(x, w, b):
        return x @ w.T + b

    def split(x):
        return x.reshape(bs, seq, heads, d_k).transpose(0, 2, 1, 3)

    qh = split(lin(q, params["wq"], params["bq"]))
    kh = split(lin(k, params["wk"], params["bk"]))
    vh = split(lin(v, params["wv"], params["bv"]))
    s = jnp.einsum("bhqd,bhkd->bhqk", qh, kh) / math.sqrt(d_k)
    p = jax.nn.softmax(s, axis=-1)
    o = jnp.einsum("bhqk,bhkd->bhqd", p, vh)
    concat = o.transpose(0, 2, 1, 3).reshape(bs, seq, d_model)
    return lin(concat, params["wo"], params["bo"])


if __name__ == "__main__":
    heads, d_model = 4, 32
    bs, seq = 2, 8

    key = jax.random.PRNGKey(0)
    keys = jax.random.split(key, 11)

    def init_linear(kw, kb, d_in, d_out):
        bound = 1.0 / math.sqrt(d_in)        # PyTorch nn.Linear default init
        w = jax.random.uniform(kw, (d_out, d_in), jnp.float32, -bound, bound)
        b = jax.random.uniform(kb, (d_out,), jnp.float32, -bound, bound)
        return w, b

    wq, bq = init_linear(keys[0], keys[1], d_model, d_model)
    wk, bk = init_linear(keys[2], keys[3], d_model, d_model)
    wv, bv = init_linear(keys[4], keys[5], d_model, d_model)
    wo, bo = init_linear(keys[6], keys[7], d_model, d_model)
    params = dict(wq=wq, bq=bq, wk=wk, bk=bk, wv=wv, bv=bv, wo=wo, bo=bo)

    q = jax.random.normal(keys[8], (bs, seq, d_model), jnp.float32)
    k = jax.random.normal(keys[9], (bs, seq, d_model), jnp.float32)
    v = jax.random.normal(keys[10], (bs, seq, d_model), jnp.float32)

    out = multihead_attention(q, k, v, params, heads)
    out = jax.block_until_ready(out)

    ref = _reference(q, k, v, params, heads)
    assert out.shape == (bs, seq, d_model)
    assert jnp.allclose(out, ref, atol=1e-4, rtol=1e-4)

    print("KERNEL_OK")
</pallas_src>

<mosaic_0001>
module attributes {stable_mosaic.version = 11 : i64} {
  func.func @_mha_kernel(%arg0: i32, %arg1: memref<1x8x32xf32, #tpu.memory_space<vmem>>, %arg2: memref<1x8x32xf32, #tpu.memory_space<vmem>>, %arg3: memref<1x8x32xf32, #tpu.memory_space<vmem>>, %arg4: memref<4x32x32xf32, #tpu.memory_space<vmem>>, %arg5: memref<4x1x32xf32, #tpu.memory_space<vmem>>, %arg6: memref<1x8x32xf32, #tpu.memory_space<vmem>>) attributes {dimension_semantics = [#tpu.dimension_semantics<parallel>], iteration_bounds = array<i64: 2>, scalar_prefetch = 0 : i64, scratch_operands = 0 : i64, tpu.core_type = #tpu.core_type<tc>, window_params = [{transform_indices = @transform_0, window_bounds = array<i64: 1, 8, 32>}, {transform_indices = @transform_1, window_bounds = array<i64: 1, 8, 32>}, {transform_indices = @transform_2, window_bounds = array<i64: 1, 8, 32>}, {pipeline_mode = #tpu.pipeline_mode<synchronous>, transform_indices = @transform_3, window_bounds = array<i64: 4, 32, 32>}, {pipeline_mode = #tpu.pipeline_mode<synchronous>, transform_indices = @transform_4, window_bounds = array<i64: 4, 1, 32>}, {transform_indices = @transform_5, window_bounds = array<i64: 1, 8, 32>}]} {
    %c0 = arith.constant 0 : index
    %c0_0 = arith.constant 0 : index
    %c0_1 = arith.constant 0 : index
    %0 = vector.load %arg1[%c0, %c0_0, %c0_1] : memref<1x8x32xf32, #tpu.memory_space<vmem>>, vector<1x8x32xf32>
    %1 = vector.shape_cast %0 : vector<1x8x32xf32> to vector<8x32xf32>
    %c0_2 = arith.constant 0 : index
    %c0_3 = arith.constant 0 : index
    %c0_4 = arith.constant 0 : index
    %2 = vector.load %arg2[%c0_2, %c0_3, %c0_4] : memref<1x8x32xf32, #tpu.memory_space<vmem>>, vector<1x8x32xf32>
    %3 = vector.shape_cast %2 : vector<1x8x32xf32> to vector<8x32xf32>
    %c0_5 = arith.constant 0 : index
    %c0_6 = arith.constant 0 : index
    %c0_7 = arith.constant 0 : index
    %4 = vector.load %arg3[%c0_5, %c0_6, %c0_7] : memref<1x8x32xf32, #tpu.memory_space<vmem>>, vector<1x8x32xf32>
    %5 = vector.shape_cast %4 : vector<1x8x32xf32> to vector<8x32xf32>
    %c0_8 = arith.constant 0 : index
    %c0_9 = arith.constant 0 : index
    %c0_10 = arith.constant 0 : index
    %6 = vector.load %arg4[%c0_8, %c0_9, %c0_10] : memref<4x32x32xf32, #tpu.memory_space<vmem>>, vector<1x32x32xf32>
    %7 = vector.shape_cast %6 : vector<1x32x32xf32> to vector<32x32xf32>
    %cst = arith.constant dense<0.000000e+00> : vector<8x32xf32>
    %8 = tpu.matmul %1, %7, %cst {dimension_numbers = #tpu.dot_dimension_numbers<[1], [0], [0], [1], [0, 0, 1, 1], [], []>} : vector<8x32xf32>, vector<32x32xf32>, vector<8x32xf32> -> vector<8x32xf32>
    %c0_11 = arith.constant 0 : index
    %c0_12 = arith.constant 0 : index
    %c0_13 = arith.constant 0 : index
    %9 = vector.load %arg5[%c0_11, %c0_12, %c0_13] : memref<4x1x32xf32, #tpu.memory_space<vmem>>, vector<1x1x32xf32>
    %10 = vector.shape_cast %9 : vector<1x1x32xf32> to vector<1x32xf32>
    %11 = vector.broadcast %10 : vector<1x32xf32> to vector<8x32xf32>
    %12 = arith.addf %8, %11 : vector<8x32xf32>
    %c1 = arith.constant 1 : index
    %c0_14 = arith.constant 0 : index
    %c0_15 = arith.constant 0 : index
    %13 = vector.load %arg4[%c1, %c0_14, %c0_15] : memref<4x32x32xf32, #tpu.memory_space<vmem>>, vector<1x32x32xf32>
    %14 = vector.shape_cast %13 : vector<1x32x32xf32> to vector<32x32xf32>
    %cst_16 = arith.constant dense<0.000000e+00> : vector<8x32xf32>
    %15 = tpu.matmul %3, %14, %cst_16 {dimension_numbers = #tpu.dot_dimension_numbers<[1], [0], [0], [1], [0, 0, 1, 1], [], []>} : vector<8x32xf32>, vector<32x32xf32>, vector<8x32xf32> -> vector<8x32xf32>
    %c1_17 = arith.constant 1 : index
    %c0_18 = arith.constant 0 : index
    %c0_19 = arith.constant 0 : index
    %16 = vector.load %arg5[%c1_17, %c0_18, %c0_19] : memref<4x1x32xf32, #tpu.memory_space<vmem>>, vector<1x1x32xf32>
    %17 = vector.shape_cast %16 : vector<1x1x32xf32> to vector<1x32xf32>
    %18 = vector.broadcast %17 : vector<1x32xf32> to vector<8x32xf32>
    %19 = arith.addf %15, %18 : vector<8x32xf32>
    %c2 = arith.constant 2 : index
    %c0_20 = arith.constant 0 : index
    %c0_21 = arith.constant 0 : index
    %20 = vector.load %arg4[%c2, %c0_20, %c0_21] : memref<4x32x32xf32, #tpu.memory_space<vmem>>, vector<1x32x32xf32>
    %21 = vector.shape_cast %20 : vector<1x32x32xf32> to vector<32x32xf32>
    %cst_22 = arith.constant dense<0.000000e+00> : vector<8x32xf32>
    %22 = tpu.matmul %5, %21, %cst_22 {dimension_numbers = #tpu.dot_dimension_numbers<[1], [0], [0], [1], [0, 0, 1, 1], [], []>} : vector<8x32xf32>, vector<32x32xf32>, vector<8x32xf32> -> vector<8x32xf32>
    %c2_23 = arith.constant 2 : index
    %c0_24 = arith.constant 0 : index
    %c0_25 = arith.constant 0 : index
    %23 = vector.load %arg5[%c2_23, %c0_24, %c0_25] : memref<4x1x32xf32, #tpu.memory_space<vmem>>, vector<1x1x32xf32>
    %24 = vector.shape_cast %23 : vector<1x1x32xf32> to vector<1x32xf32>
    %25 = vector.broadcast %24 : vector<1x32xf32> to vector<8x32xf32>
    %26 = arith.addf %22, %25 : vector<8x32xf32>
    %cst_26 = arith.constant 0.353553385 : f32
    %27 = vector.broadcast %cst_26 : f32 to vector<8x32xf32>
    %28 = arith.mulf %12, %27 : vector<8x32xf32>
    %29 = vector.extract_strided_slice %28 {offsets = [0, 0], sizes = [8, 8], strides = [1, 1]} : vector<8x32xf32> to vector<8x8xf32>
    %30 = vector.extract_strided_slice %19 {offsets = [0, 0], sizes = [8, 8], strides = [1, 1]} : vector<8x32xf32> to vector<8x8xf32>
    %31 = vector.extract_strided_slice %26 {offsets = [0, 0], sizes = [8, 8], strides = [1, 1]} : vector<8x32xf32> to vector<8x8xf32>
    %cst_27 = arith.constant dense<0.000000e+00> : vector<8x8xf32>
    %32 = tpu.matmul %29, %30, %cst_27 {dimension_numbers = #tpu.dot_dimension_numbers<[1], [1], [0], [0], [0, 0, 1, 0], [], []>} : vector<8x8xf32>, vector<8x8xf32>, vector<8x8xf32> -> vector<8x8xf32>
    %cst_28 = arith.constant dense<0xFF800000> : vector<8xf32>
    %33 = vector.multi_reduction <maximumf>, %32, %cst_28 [1] : vector<8x8xf32> to vector<8xf32>
    %34 = vector.shape_cast %33 : vector<8xf32> to vector<8x1xf32>
    %35 = vector.broadcast %34 : vector<8x1xf32> to vector<8x8xf32>
    %36 = arith.subf %32, %35 : vector<8x8xf32>
    %37 = math.exp %36 : vector<8x8xf32>
    %cst_29 = arith.constant dense<0.000000e+00> : vector<8xf32>
    %38 = vector.multi_reduction <add>, %37, %cst_29 [1] : vector<8x8xf32> to vector<8xf32>
    %39 = vector.shape_cast %38 : vector<8xf32> to vector<8x1xf32>
    %40 = tpu.reciprocal %39 : vector<8x1xf32> -> vector<8x1xf32>
    %41 = vector.broadcast %40 : vector<8x1xf32> to vector<8x8xf32>
    %42 = arith.mulf %37, %41 : vector<8x8xf32>
    %cst_30 = arith.constant dense<0.000000e+00> : vector<8x8xf32>
    %43 = tpu.matmul %42, %31, %cst_30 {dimension_numbers = #tpu.dot_dimension_numbers<[1], [0], [0], [1], [0, 0, 1, 1], [], []>} : vector<8x8xf32>, vector<8x8xf32>, vector<8x8xf32> -> vector<8x8xf32>
    %44 = vector.extract_strided_slice %28 {offsets = [0, 8], sizes = [8, 8], strides = [1, 1]} : vector<8x32xf32> to vector<8x8xf32>
    %45 = vector.extract_strided_slice %19 {offsets = [0, 8], sizes = [8, 8], strides = [1, 1]} : vector<8x32xf32> to vector<8x8xf32>
    %46 = vector.extract_strided_slice %26 {offsets = [0, 8], sizes = [8, 8], strides = [1, 1]} : vector<8x32xf32> to vector<8x8xf32>
    %cst_31 = arith.constant dense<0.000000e+00> : vector<8x8xf32>
    %47 = tpu.matmul %44, %45, %cst_31 {dimension_numbers = #tpu.dot_dimension_numbers<[1], [1], [0], [0], [0, 0, 1, 0], [], []>} : vector<8x8xf32>, vector<8x8xf32>, vector<8x8xf32> -> vector<8x8xf32>
    %cst_32 = arith.constant dense<0xFF800000> : vector<8xf32>
    %48 = vector.multi_reduction <maximumf>, %47, %cst_32 [1] : vector<8x8xf32> to vector<8xf32>
    %49 = vector.shape_cast %48 : vector<8xf32> to vector<8x1xf32>
    %50 = vector.broadcast %49 : vector<8x1xf32> to vector<8x8xf32>
    %51 = arith.subf %47, %50 : vector<8x8xf32>
    %52 = math.exp %51 : vector<8x8xf32>
    %cst_33 = arith.constant dense<0.000000e+00> : vector<8xf32>
    %53 = vector.multi_reduction <add>, %52, %cst_33 [1] : vector<8x8xf32> to vector<8xf32>
    %54 = vector.shape_cast %53 : vector<8xf32> to vector<8x1xf32>
    %55 = tpu.reciprocal %54 : vector<8x1xf32> -> vector<8x1xf32>
    %56 = vector.broadcast %55 : vector<8x1xf32> to vector<8x8xf32>
    %57 = arith.mulf %52, %56 : vector<8x8xf32>
    %cst_34 = arith.constant dense<0.000000e+00> : vector<8x8xf32>
    %58 = tpu.matmul %57, %46, %cst_34 {dimension_numbers = #tpu.dot_dimension_numbers<[1], [0], [0], [1], [0, 0, 1, 1], [], []>} : vector<8x8xf32>, vector<8x8xf32>, vector<8x8xf32> -> vector<8x8xf32>
    %59 = vector.extract_strided_slice %28 {offsets = [0, 16], sizes = [8, 8], strides = [1, 1]} : vector<8x32xf32> to vector<8x8xf32>
    %60 = vector.extract_strided_slice %19 {offsets = [0, 16], sizes = [8, 8], strides = [1, 1]} : vector<8x32xf32> to vector<8x8xf32>
    %61 = vector.extract_strided_slice %26 {offsets = [0, 16], sizes = [8, 8], strides = [1, 1]} : vector<8x32xf32> to vector<8x8xf32>
    %cst_35 = arith.constant dense<0.000000e+00> : vector<8x8xf32>
    %62 = tpu.matmul %59, %60, %cst_35 {dimension_numbers = #tpu.dot_dimension_numbers<[1], [1], [0], [0], [0, 0, 1, 0], [], []>} : vector<8x8xf32>, vector<8x8xf32>, vector<8x8xf32> -> vector<8x8xf32>
    %cst_36 = arith.constant dense<0xFF800000> : vector<8xf32>
    %63 = vector.multi_reduction <maximumf>, %62, %cst_36 [1] : vector<8x8xf32> to vector<8xf32>
    %64 = vector.shape_cast %63 : vector<8xf32> to vector<8x1xf32>
    %65 = vector.broadcast %64 : vector<8x1xf32> to vector<8x8xf32>
    %66 = arith.subf %62, %65 : vector<8x8xf32>
    %67 = math.exp %66 : vector<8x8xf32>
    %cst_37 = arith.constant dense<0.000000e+00> : vector<8xf32>
    %68 = vector.multi_reduction <add>, %67, %cst_37 [1] : vector<8x8xf32> to vector<8xf32>
    %69 = vector.shape_cast %68 : vector<8xf32> to vector<8x1xf32>
    %70 = tpu.reciprocal %69 : vector<8x1xf32> -> vector<8x1xf32>
    %71 = vector.broadcast %70 : vector<8x1xf32> to vector<8x8xf32>
    %72 = arith.mulf %67, %71 : vector<8x8xf32>
    %cst_38 = arith.constant dense<0.000000e+00> : vector<8x8xf32>
    %73 = tpu.matmul %72, %61, %cst_38 {dimension_numbers = #tpu.dot_dimension_numbers<[1], [0], [0], [1], [0, 0, 1, 1], [], []>} : vector<8x8xf32>, vector<8x8xf32>, vector<8x8xf32> -> vector<8x8xf32>
    %74 = vector.extract_strided_slice %28 {offsets = [0, 24], sizes = [8, 8], strides = [1, 1]} : vector<8x32xf32> to vector<8x8xf32>
    %75 = vector.extract_strided_slice %19 {offsets = [0, 24], sizes = [8, 8], strides = [1, 1]} : vector<8x32xf32> to vector<8x8xf32>
    %76 = vector.extract_strided_slice %26 {offsets = [0, 24], sizes = [8, 8], strides = [1, 1]} : vector<8x32xf32> to vector<8x8xf32>
    %cst_39 = arith.constant dense<0.000000e+00> : vector<8x8xf32>
    %77 = tpu.matmul %74, %75, %cst_39 {dimension_numbers = #tpu.dot_dimension_numbers<[1], [1], [0], [0], [0, 0, 1, 0], [], []>} : vector<8x8xf32>, vector<8x8xf32>, vector<8x8xf32> -> vector<8x8xf32>
    %cst_40 = arith.constant dense<0xFF800000> : vector<8xf32>
    %78 = vector.multi_reduction <maximumf>, %77, %cst_40 [1] : vector<8x8xf32> to vector<8xf32>
    %79 = vector.shape_cast %78 : vector<8xf32> to vector<8x1xf32>
    %80 = vector.broadcast %79 : vector<8x1xf32> to vector<8x8xf32>
    %81 = arith.subf %77, %80 : vector<8x8xf32>
    %82 = math.exp %81 : vector<8x8xf32>
    %cst_41 = arith.constant dense<0.000000e+00> : vector<8xf32>
    %83 = vector.multi_reduction <add>, %82, %cst_41 [1] : vector<8x8xf32> to vector<8xf32>
    %84 = vector.shape_cast %83 : vector<8xf32> to vector<8x1xf32>
    %85 = tpu.reciprocal %84 : vector<8x1xf32> -> vector<8x1xf32>
    %86 = vector.broadcast %85 : vector<8x1xf32> to vector<8x8xf32>
    %87 = arith.mulf %82, %86 : vector<8x8xf32>
    %cst_42 = arith.constant dense<0.000000e+00> : vector<8x8xf32>
    %88 = tpu.matmul %87, %76, %cst_42 {dimension_numbers = #tpu.dot_dimension_numbers<[1], [0], [0], [1], [0, 0, 1, 1], [], []>} : vector<8x8xf32>, vector<8x8xf32>, vector<8x8xf32> -> vector<8x8xf32>
    %89 = tpu.concatenate %43, %58, %73, %88 in 1 : vector<8x8xf32>, vector<8x8xf32>, vector<8x8xf32>, vector<8x8xf32> -> vector<8x32xf32>
    %c3 = arith.constant 3 : index
    %c0_43 = arith.constant 0 : index
    %c0_44 = arith.constant 0 : index
    %90 = vector.load %arg4[%c3, %c0_43, %c0_44] : memref<4x32x32xf32, #tpu.memory_space<vmem>>, vector<1x32x32xf32>
    %91 = vector.shape_cast %90 : vector<1x32x32xf32> to vector<32x32xf32>
    %cst_45 = arith.constant dense<0.000000e+00> : vector<8x32xf32>
    %92 = tpu.matmul %89, %91, %cst_45 {dimension_numbers = #tpu.dot_dimension_numbers<[1], [0], [0], [1], [0, 0, 1, 1], [], []>} : vector<8x32xf32>, vector<32x32xf32>, vector<8x32xf32> -> vector<8x32xf32>
    %c3_46 = arith.constant 3 : index
    %c0_47 = arith.constant 0 : index
    %c0_48 = arith.constant 0 : index
    %93 = vector.load %arg5[%c3_46, %c0_47, %c0_48] : memref<4x1x32xf32, #tpu.memory_space<vmem>>, vector<1x1x32xf32>
    %94 = vector.shape_cast %93 : vector<1x1x32xf32> to vector<1x32xf32>
    %95 = vector.broadcast %94 : vector<1x32xf32> to vector<8x32xf32>
    %96 = arith.addf %92, %95 : vector<8x32xf32>
    %c0_49 = arith.constant 0 : index
    %c0_50 = arith.constant 0 : index
    %c0_51 = arith.constant 0 : index
    %97 = vector.load %arg6[%c0_49, %c0_50, %c0_51] : memref<1x8x32xf32, #tpu.memory_space<vmem>>, vector<1x8x32xf32>
    %98 = vector.shape_cast %97 : vector<1x8x32xf32> to vector<8x32xf32>
    %99 = vector.shape_cast %96 : vector<8x32xf32> to vector<1x8x32xf32>
    tpu.vector_store %arg6[%c0_49, %c0_50, %c0_51], %99 {strides = array<i32>} : memref<1x8x32xf32, #tpu.memory_space<vmem>>, vector<1x8x32xf32>,
    return
  }
  func.func @transform_0(%arg0: i32) -> (i32, i32, i32) {
    %c0_i32 = arith.constant 0 : i32
    %c0_i32_0 = arith.constant 0 : i32
    %c0_i32_1 = arith.constant 0 : i32
    return %arg0, %c0_i32, %c0_i32_0 : i32, i32, i32
  }
  func.func @transform_1(%arg0: i32) -> (i32, i32, i32) {
    %c0_i32 = arith.constant 0 : i32
    %c0_i32_0 = arith.constant 0 : i32
    %c0_i32_1 = arith.constant 0 : i32
    return %arg0, %c0_i32, %c0_i32_0 : i32, i32, i32
  }
  func.func @transform_2(%arg0: i32) -> (i32, i32, i32) {
    %c0_i32 = arith.constant 0 : i32
    %c0_i32_0 = arith.constant 0 : i32
    %c0_i32_1 = arith.constant 0 : i32
    return %arg0, %c0_i32, %c0_i32_0 : i32, i32, i32
  }
  func.func @transform_3(%arg0: i32) -> (i32, i32, i32) {
    %c0_i32 = arith.constant 0 : i32
    %c0_i32_0 = arith.constant 0 : i32
    %c0_i32_1 = arith.constant 0 : i32
    %c0_i32_2 = arith.constant 0 : i32
    return %c0_i32, %c0_i32_0, %c0_i32_1 : i32, i32, i32
  }
  func.func @transform_4(%arg0: i32) -> (i32, i32, i32) {
    %c0_i32 = arith.constant 0 : i32
    %c0_i32_0 = arith.constant 0 : i32
    %c0_i32_1 = arith.constant 0 : i32
    %c0_i32_2 = arith.constant 0 : i32
    return %c0_i32, %c0_i32_0, %c0_i32_1 : i32, i32, i32
  }
  func.func @transform_5(%arg0: i32) -> (i32, i32, i32) {
    %c0_i32 = arith.constant 0 : i32
    %c0_i32_0 = arith.constant 0 : i32
    %c0_i32_1 = arith.constant 0 : i32
    return %arg0, %c0_i32, %c0_i32_0 : i32, i32, i32
  }
}

</mosaic_0001>

<llo_original>
// kernel: tpu_custom_call.1
$region0: #{tpu_custom_call.1}
  #allocation0 [shape = 'u32[]', space=smem, size = 0x4, offset = 0x4, fixed_abs, tag = 'smem constant byte address 0x4 - core index']
  #allocation1 [shape = 'u32[144,128]{1,0:T(1,128)}', space=vmem, size = 0x12000, scoped, tag = 'internal scratch']
  %s0 = inlined_call_operand.hbm [shape: f32[2,8,32], index: 0, kind: input, shape index: {}]
  %s1 = inlined_call_operand.hbm [shape: f32[2,8,32], index: 1, kind: input, shape index: {}]
  %s2 = inlined_call_operand.hbm [shape: f32[2,8,32], index: 2, kind: input, shape index: {}]
  %s3 = inlined_call_operand.hbm [shape: f32[4,32,32], index: 3, kind: input, shape index: {}]
  %s4 = inlined_call_operand.vmem [shape: f32[4,1,32], index: 4, kind: input, shape index: {}]
  %s5 = inlined_call_operand.hbm [shape: f32[2,8,32], index: 5, kind: output, shape index: {}]
  %s6 = sld [smem:[#allocation0]]
  $region69: #{tpu_custom_call.1} parent=0
    _
  %s8 = ssub.s32 1, %s6
  %s9 = scalar_select 0, %s8, %s6
  $region1: #{tpu_custom_call.1} parent=0
    #allocation2 [shape = 'u8[8192]{0}', space=vmem, size = 0x2000, scoped, tag = 'input window, operand 0']
    #allocation3 [shape = 's32[2]{0}', space=sflag, size = 0x8, scoped, tag = 'scoped memory for tpu_custom_call.1']
    #allocation4 [shape = 's32[2]{0}', space=sflag, size = 0x8, scoped, tag = 'scoped memory for tpu_custom_call.1']
    #allocation5 [shape = 'u8[8192]{0}', space=vmem, size = 0x2000, scoped, tag = 'input window, operand 1']
    #allocation6 [shape = 's32[2]{0}', space=sflag, size = 0x8, scoped, tag = 'scoped memory for tpu_custom_call.1']
    #allocation7 [shape = 'u8[8192]{0}', space=vmem, size = 0x2000, scoped, tag = 'input window, operand 2']
    #allocation8 [shape = 'u8[65536]{0}', space=vmem, size = 0x10000, scoped, tag = 'input window, operand 3, single buffered']
    #allocation9 [shape = 's32[1]{0}', space=sflag, size = 0x4, scoped, tag = 'scoped memory for tpu_custom_call.1']
    #allocation10 [shape = 'u8[8192]{0}', space=vmem, size = 0x2000, scoped, tag = 'output window, operand 0']
    %10 = vsyncpa [#allocation3], 0
    %s11 = scalar_lea.sflag [#allocation3], 1
    %12 = vsyncpa %s11, 0
    %13 = vsyncpa [#allocation6], 0
    %s14 = scalar_lea.sflag [#allocation6], 1
    %15 = vsyncpa %s14, 0
    %16 = vsyncpa [#allocation9], 0
    %17 = vsyncpa [#allocation4], 0
    %s18 = scalar_lea.sflag [#allocation4], 1
    %19 = vsyncpa %s18, 0
    loop: start=0, step=1, limit=4
    $region2: #{tpu_custom_call.1} parent=1 // loop_pre_header
      _
    $region3: #{tpu_custom_call.1} parent=1 // loop_header
      %s21 = sphi 0, %s25
      %p22 = scmp.ge.s32.totalorder %s21, 4
      %s31 = sphi 0, %s33
      %s34 = sphi 0, %s31
      %s35 = sphi 0, %s34
      %s51 = sphi 0, %s35
      %s57 = sphi 0, %s59
      %s60 = sphi 0, %s57
      %s61 = sphi 0, %s60
      %s77 = sphi 0, %s61
      %s83 = sphi 0, %s85
      %s86 = sphi 0, %s83
      %s87 = sphi 0, %s86
      %s103 = sphi 0, %s87
      %s107 = sphi 0, %s107
      %s109 = sphi 0, %s107
      %s110 = sphi 0, %s109
      %s124 = sphi 0, %s110
      %s128 = sphi 0, %s128
      %s130 = sphi 0, %s128
      %s131 = sphi 0, %s130
      %s145 = sphi 0, %s131
      %s151 = sphi 0, %s153
      %s154 = sphi 0, %s151
      %s155 = sphi 0, %s154
      %s171 = sphi 0, %s155
    $region4: #{tpu_custom_call.1} parent=1 // loop_header_branch
      %24 = sbr.rel (%p22) target = $region8
    $region5: #{tpu_custom_call.1} parent=1 // loop_body
      %s26 = ssub.s32 %s21, 1
      %s27 = ssub.s32 %s21, 2
      %s28 = sadd.s32 %s21, 1
      %s29 = ssub.s32 %s21, %s28
      %p30 = scmp.eq.s32.totalorder %s29, 0
      %s32 = sadd.s32 %s31, 1
      %s33 = scalar_select %p30, %s31, %s32
      %p36 = pneg %p30
      %p37 = scmp.eq.s32.totalorder %s21, 1
      %p38 = por %p36, %p37
      %p39 = scmp.ne.s32.totalorder %s31, %s34
      %p40 = scmp.eq.s32.totalorder %s21, 0
      %p41 = por %p39, %p40
      %p42 = scmp.ne.s32.totalorder %s31, %s34
      %p43 = scmp.eq.s32.totalorder %s26, 1
      %p44 = por %p42, %p43
      %p45 = scmp.ne.s32.totalorder %s34, %s35
      %p46 = scmp.eq.s32.totalorder %s26, 0
      %p47 = por %p45, %p46
      %p48 = scmp.ne.s32.totalorder %s34, %s35
      %p49 = scmp.eq.s32.totalorder %s27, 1
      %p50 = por %p48, %p49
      %p52 = scmp.ne.s32.totalorder %s35, %s51
      %p53 = scmp.eq.s32.totalorder %s27, 0
      %p54 = por %p52, %p53
      %s55 = ssub.s32 %s21, %s28
      %p56 = scmp.eq.s32.totalorder %s55, 0
      %s58 = sadd.s32 %s57, 1
      %s59 = scalar_select %p56, %s57, %s58
      %p62 = pneg %p56
      %p63 = scmp.eq.s32.totalorder %s21, 1
      %p64 = por %p62, %p63
      %p65 = scmp.ne.s32.totalorder %s57, %s60
      %p66 = scmp.eq.s32.totalorder %s21, 0
      %p67 = por %p65, %p66
      %p68 = scmp.ne.s32.totalorder %s57, %s60
      %p69 = scmp.eq.s32.totalorder %s26, 1
      %p70 = por %p68, %p69
      %p71 = scmp.ne.s32.totalorder %s60, %s61
      %p72 = scmp.eq.s32.totalorder %s26, 0
      %p73 = por %p71, %p72
      %p74 = scmp.ne.s32.totalorder %s60, %s61
      %p75 = scmp.eq.s32.totalorder %s27, 1
      %p76 = por %p74, %p75
      %p78 = scmp.ne.s32.totalorder %s61, %s77
      %p79 = scmp.eq.s32.totalorder %s27, 0
      %p80 = por %p78, %p79
      %s81 = ssub.s32 %s21, %s28
      %p82 = scmp.eq.s32.totalorder %s81, 0
      %s84 = sadd.s32 %s83, 1
      %s85 = scalar_select %p82, %s83, %s84
      %p88 = pneg %p82
      %p89 = scmp.eq.s32.totalorder %s21, 1
      %p90 = por %p88, %p89
      %p91 = scmp.ne.s32.totalorder %s83, %s86
      %p92 = scmp.eq.s32.totalorder %s21, 0
      %p93 = por %p91, %p92
      %p94 = scmp.ne.s32.totalorder %s83, %s86
      %p95 = scmp.eq.s32.totalorder %s26, 1
      %p96 = por %p94, %p95
      %p97 = scmp.ne.s32.totalorder %s86, %s87
      %p98 = scmp.eq.s32.totalorder %s26, 0
      %p99 = por %p97, %p98
      %p100 = scmp.ne.s32.totalorder %s86, %s87
      %p101 = scmp.eq.s32.totalorder %s27, 1
      %p102 = por %p100, %p101
      %p104 = scmp.ne.s32.totalorder %s87, %s103
      %p105 = scmp.eq.s32.totalorder %s27, 0
      %p106 = por %p104, %p105
      %s108 = sadd.s32 %s107, 1
      %p111 = scmp.eq.s32.totalorder %s21, 1
      %p112 = scmp.ne.s32.totalorder %s107, %s109
      %p113 = scmp.eq.s32.totalorder %s21, 0
      %p114 = por %p112, %p113
      %p115 = scmp.ne.s32.totalorder %s107, %s109
      %p116 = scmp.eq.s32.totalorder %s26, 1
      %p117 = por %p115, %p116
      %p118 = scmp.ne.s32.totalorder %s109, %s110
      %p119 = scmp.eq.s32.totalorder %s26, 0
      %p120 = por %p118, %p119
      %p121 = scmp.ne.s32.totalorder %s109, %s110
      %p122 = scmp.eq.s32.totalorder %s27, 1
      %p123 = por %p121, %p122
      %p125 = scmp.ne.s32.totalorder %s110, %s124
      %p126 = scmp.eq.s32.totalorder %s27, 0
      %p127 = por %p125, %p126
      %s129 = sadd.s32 %s128, 1
      %p132 = scmp.eq.s32.totalorder %s21, 1
      %p133 = scmp.ne.s32.totalorder %s128, %s130
      %p134 = scmp.eq.s32.totalorder %s21, 0
      %p135 = por %p133, %p134
      %p136 = scmp.ne.s32.totalorder %s128, %s130
      %p137 = scmp.eq.s32.totalorder %s26, 1
      %p138 = por %p136, %p137
      %p139 = scmp.ne.s32.totalorder %s130, %s131
      %p140 = scmp.eq.s32.totalorder %s26, 0
      %p141 = por %p139, %p140
      %p142 = scmp.ne.s32.totalorder %s130, %s131
      %p143 = scmp.eq.s32.totalorder %s27, 1
      %p144 = por %p142, %p143
      %p146 = scmp.ne.s32.totalorder %s131, %s145
      %p147 = scmp.eq.s32.totalorder %s27, 0
      %p148 = por %p146, %p147
      %s149 = ssub.s32 %s21, %s28
      %p150 = scmp.eq.s32.totalorder %s149, 0
      %s152 = sadd.s32 %s151, 1
      %s153 = scalar_select %p150, %s151, %s152
      %p156 = pneg %p150
      %p157 = scmp.eq.s32.totalorder %s21, 1
      %p158 = por %p156, %p157
      %p159 = scmp.ne.s32.totalorder %s151, %s154
      %p160 = scmp.eq.s32.totalorder %s21, 0
      %p161 = por %p159, %p160
      %p162 = scmp.ne.s32.totalorder %s151, %s154
      %p163 = scmp.eq.s32.totalorder %s26, 1
      %p164 = por %p162, %p163
      %p165 = scmp.ne.s32.totalorder %s154, %s155
      %p166 = scmp.eq.s32.totalorder %s26, 0
      %p167 = por %p165, %p166
      %p168 = scmp.ne.s32.totalorder %s154, %s155
      %p169 = scmp.eq.s32.totalorder %s27, 1
      %p170 = por %p168, %p169
      %p172 = scmp.ne.s32.totalorder %s155, %s171
      %p173 = scmp.eq.s32.totalorder %s27, 0
      %p174 = por %p172, %p173
      %p175 = scmp.le.s32.totalorder 1, %s21
      %p176 = scmp.lt.s32.totalorder %s21, 3
      %p177 = pnand %p175, %p176
      %p178 = pneg %p177
      // Predicated region
      $region9: #{tpu_custom_call.1} parent=5 // pred_check
        _
      $region10: #{tpu_custom_call.1} parent=5 // pred_check_branch
        %180 = sbr.rel (%p177) target = $region12
      $region11: #{tpu_custom_call.1} parent=5 // pred_region
        %s181 = ssub.s32 %s21, 1
        // Predicated region
        $region13: #{tpu_custom_call.1} parent=11 // pred_check
          %p182 = pneg %p120
        $region14: #{tpu_custom_call.1} parent=11 // pred_check_branch
          %184 = sbr.rel (%p182) target = $region16
        $region15: #{tpu_custom_call.1} parent=11 // pred_region
          %s186 = ssub.s32 2048, 2048
          %187 = vsyncadd [#allocation9], %s186
          %s188 = sshll.u32 [#allocation8], 4
          %s189 = int_to_ptr.vmem [resolvable:$true] %s188
          %194 = dma.hbm_to_vmem [thread:$0]  %s3, 2048, %s189, [#allocation9], 128, 128, 8
        $region16: #{tpu_custom_call.1} parent=11 // pred_fallthru
          _
        // Predicated region
        $region17: #{tpu_custom_call.1} parent=11 // pred_check
          %p195 = pneg %p141
        $region18: #{tpu_custom_call.1} parent=11 // pred_check_branch
          %197 = sbr.rel (%p195) target = $region20
        $region19: #{tpu_custom_call.1} parent=11 // pred_region
          _
        $region20: #{tpu_custom_call.1} parent=11 // pred_fallthru
          _
      $region12: #{tpu_custom_call.1} parent=5 // pred_fallthru
        _
      %p198 = scmp.lt.s32.totalorder %s21, 2
      // Predicated region
      $region21: #{tpu_custom_call.1} parent=5 // pred_check
        %p199 = pneg %p198
      $region22: #{tpu_custom_call.1} parent=5 // pred_check_branch
        %201 = sbr.rel (%p199) target = $region24
      $region23: #{tpu_custom_call.1} parent=5 // pred_region
        // Predicated region
        $region25: #{tpu_custom_call.1} parent=23 // pred_check
          %p202 = pneg %p41
        $region26: #{tpu_custom_call.1} parent=23 // pred_check_branch
          %204 = sbr.rel (%p202) target = $region28
        $region27: #{tpu_custom_call.1} parent=23 // pred_region
          %s205 = sand.u32 %s31, 1
          %s206 = scalar_lea.sflag [#allocation3], %s205
          %s207 = sand.u32 %s31, 1
          %s208 = smul.addr %s207, 8
          %s209 = scalar_lea.vmem [#allocation2], %s208
          %s211 = ssub.s32 128, 128
          %212 = vsyncadd %s206, %s211
          %s213 = smul.addr %s21, 128
          %s214 = scalar_lea.hbm %s0, %s213
          %s216 = sshll.u32 %s209, 4
          %s217 = int_to_ptr.vmem [resolvable:$true] %s216
          %219 = dma.hbm_to_vmem [thread:$0]  %s214, 128, %s217, %s206
        $region28: #{tpu_custom_call.1} parent=23 // pred_fallthru
          _
        // Predicated region
        $region29: #{tpu_custom_call.1} parent=23 // pred_check
          %p220 = pneg %p67
        $region30: #{tpu_custom_call.1} parent=23 // pred_check_branch
          %222 = sbr.rel (%p220) target = $region32
        $region31: #{tpu_custom_call.1} parent=23 // pred_region
          %s223 = sand.u32 %s21, 1
          %s224 = scalar_lea.sflag [#allocation6], %s223
          %s225 = sand.u32 %s57, 1
          %s226 = smul.addr %s225, 8
          %s227 = scalar_lea.vmem [#allocation5], %s226
          %s229 = ssub.s32 128, 128
          %230 = vsyncadd %s224, %s229
          %s231 = smul.addr %s21, 128
          %s232 = scalar_lea.hbm %s1, %s231
          %s234 = sshll.u32 %s227, 4
          %s235 = int_to_ptr.vmem [resolvable:$true] %s234
          %237 = dma.hbm_to_vmem [thread:$0]  %s232, 128, %s235, %s224
        $region32: #{tpu_custom_call.1} parent=23 // pred_fallthru
          _
        // Predicated region
        $region33: #{tpu_custom_call.1} parent=23 // pred_check
          %p238 = pneg %p93
        $region34: #{tpu_custom_call.1} parent=23 // pred_check_branch
          %240 = sbr.rel (%p238) target = $region36
        $region35: #{tpu_custom_call.1} parent=23 // pred_region
          %s241 = sand.u32 %s21, 1
          %s242 = scalar_lea.sflag [#allocation6], %s241
          %s243 = sand.u32 %s83, 1
          %s244 = smul.addr %s243, 8
          %s245 = scalar_lea.vmem [#allocation7], %s244
          %s247 = ssub.s32 128, 128
          %248 = vsyncadd %s242, %s247
          %s249 = smul.addr %s21, 128
          %s250 = scalar_lea.hbm %s2, %s249
          %s252 = sshll.u32 %s245, 4
          %s253 = int_to_ptr.vmem [resolvable:$true] %s252
          %255 = dma.hbm_to_vmem [thread:$0]  %s250, 128, %s253, %s242
        $region36: #{tpu_custom_call.1} parent=23 // pred_fallthru
          _
      $region24: #{tpu_custom_call.1} parent=5 // pred_fallthru
        _
      %p256 = scmp.le.s32.totalorder 1, %s21
      %p257 = scmp.lt.s32.totalorder %s21, 3
      %p258 = pnand %p256, %p257
      %p259 = pneg %p258
      // Predicated region
      $region37: #{tpu_custom_call.1} parent=5 // pred_check
        _
      $region38: #{tpu_custom_call.1} parent=5 // pred_check_branch
        %261 = sbr.rel (%p258) target = $region40
      $region39: #{tpu_custom_call.1} parent=5 // pred_region
        %s262 = ssub.s32 %s21, 1
        %s263 = sand.u32 %s34, 1
        %s264 = scalar_lea.sflag [#allocation3], %s263
        %s265 = sand.u32 %s34, 1
        %s266 = smul.addr %s265, 8
        %s267 = scalar_lea.vmem [#allocation2], %s266
        // Predicated region
        $region41: #{tpu_custom_call.1} parent=39 // pred_check
          %p268 = pneg %p47
        $region42: #{tpu_custom_call.1} parent=39 // pred_check_branch
          %270 = sbr.rel (%p268) target = $region44
        $region43: #{tpu_custom_call.1} parent=39 // pred_region
          %271 = dma.done %s264, 128
        $region44: #{tpu_custom_call.1} parent=39 // pred_fallthru
          _
        %s272 = sand.u32 %s26, 1
        %s273 = scalar_lea.sflag [#allocation6], %s272
        %s274 = sand.u32 %s60, 1
        %s275 = smul.addr %s274, 8
        %s276 = scalar_lea.vmem [#allocation5], %s275
        // Predicated region
        $region45: #{tpu_custom_call.1} parent=39 // pred_check
          %p277 = pneg %p73
        $region46: #{tpu_custom_call.1} parent=39 // pred_check_branch
          %279 = sbr.rel (%p277) target = $region48
        $region47: #{tpu_custom_call.1} parent=39 // pred_region
          %280 = dma.done %s273, 128
        $region48: #{tpu_custom_call.1} parent=39 // pred_fallthru
          _
        %s281 = sand.u32 %s26, 1
        %s282 = scalar_lea.sflag [#allocation6], %s281
        %s283 = sand.u32 %s86, 1
        %s284 = smul.addr %s283, 8
        %s285 = scalar_lea.vmem [#allocation7], %s284
        // Predicated region
        $region49: #{tpu_custom_call.1} parent=39 // pred_check
          %p286 = pneg %p99
        $region50: #{tpu_custom_call.1} parent=39 // pred_check_branch
          %288 = sbr.rel (%p286) target = $region52
        $region51: #{tpu_custom_call.1} parent=39 // pred_region
          %289 = dma.done %s282, 128
        $region52: #{tpu_custom_call.1} parent=39 // pred_fallthru
          _
        // Predicated region
        $region53: #{tpu_custom_call.1} parent=39 // pred_check
          %p290 = pneg %p120
        $region54: #{tpu_custom_call.1} parent=39 // pred_check_branch
          %292 = sbr.rel (%p290) target = $region56
        $region55: #{tpu_custom_call.1} parent=39 // pred_region
          %293 = dma.done [#allocation9], 2048
        $region56: #{tpu_custom_call.1} parent=39 // pred_fallthru
          _
        %s294 = sand.u32 %s34, 1
        %s295 = scalar_lea.sflag [#allocation3], %s294
        %s296 = sand.u32 %s34, 1
        %s297 = smul.addr %s296, 8
        %s298 = scalar_lea.vmem [#allocation2], %s297
        %p299 = pneg %p47
        %p300 = pneg %p44
        %s301 = sand.u32 %s26, 1
        %s302 = scalar_lea.sflag [#allocation6], %s301
        %s303 = sand.u32 %s60, 1
        %s304 = smul.addr %s303, 8
        %s305 = scalar_lea.vmem [#allocation5], %s304
        %p306 = pneg %p73
        %p307 = pneg %p70
        %s308 = sand.u32 %s26, 1
        %s309 = scalar_lea.sflag [#allocation6], %s308
        %s310 = sand.u32 %s86, 1
        %s311 = smul.addr %s310, 8
        %s312 = scalar_lea.vmem [#allocation7], %s311
        %p313 = pneg %p99
        %p314 = pneg %p96
        %p315 = pneg %p120
        %p316 = pneg %p117
        %p317 = pneg %p141
        %p318 = pneg %p138
        %p319 = pneg %p167
        %p320 = pneg %p164
        %s321 = sand.u32 %s154, 1
        %s322 = scalar_lea.sflag [#allocation4], %s321
        %s323 = sand.u32 %s154, 1
        %s324 = smul.addr %s323, 8
        %s325 = scalar_lea.vmem [#allocation10], %s324
        %v326 = vld [vmem:[%s267] sm:$0xff]
        %v327 = vld [vmem:[%s276] sm:$0xff]
        %v328 = vld [vmem:[%s285] sm:$0xff]
        %v329 = vld [vmem:[#allocation8] sm:$0xff]
        %v330 = vld [vmem:[#allocation8 + $0x8] sm:$0xff]
        %v331 = vld [vmem:[#allocation8 + $0x10] sm:$0xff]
        %v332 = vld [vmem:[#allocation8 + $0x18] sm:$0xff]
        %v333 = vld [vmem:[%s4] sm:$0x1]
        %v335 = vlaneseq
        %v336 = vshrl.u32 %v335, 7
        %v337 = vsub.s32 0, %v336
        %v338 = vrot.slane %v333, %v337
        %vm340 = vcmask 261120
        %v342 = vsel %vm340, %v326, 0
        %344 = vmatprep.subr.mxu0 0.0
        %345 = vmatpush1.msra.mxu0 %v329
        %346 = vmatprep.subr.mxu0 0.0
        %347 = vmatpush1.msra.mxu0 %v330
        %348 = vmatprep.subr.mxu0 0.0
        %349 = vmatpush1.msra.mxu0 %v331
        %350 = vmatprep.subr.mxu0 0.0
        %351 = vmatpush1.msra.mxu0 %v332
        %352 = vmatprep.subr.mxu0 0.0
        %353 = vmatpush1.msra.mxu0 0.0
        %354 = vmatprep.subr.mxu0 0.0
        %355 = vmatpush1.msra.mxu0 0.0
        %356 = vmatprep.subr.mxu0 0.0
        %357 = vmatpush1.msra.mxu0 0.0
        %358 = vmatprep.subr.mxu0 0.0
        %359 = vmatpush1.msra.mxu0 0.0
        %360 = vmatprep.subr.mxu0 0.0
        %361 = vmatpush1.msra.mxu0 0.0
        %362 = vmatprep.subr.mxu0 0.0
        %363 = vmatpush1.msra.mxu0 0.0
        %364 = vmatprep.subr.mxu0 0.0
        %365 = vmatpush1.msra.mxu0 0.0
        %366 = vmatprep.subr.mxu0 0.0
        %367 = vmatpush1.msra.mxu0 0.0
        %368 = vmatprep.subr.mxu0 0.0
        %369 = vmatpush1.msra.mxu0 0.0
        %370 = vmatprep.subr.mxu0 0.0
        %371 = vmatpush1.msra.mxu0 0.0
        %372 = vmatprep.subr.mxu0 0.0
        %373 = vmatpush1.msra.mxu0 0.0
        %374 = vmatprep.subr.mxu0 0.0
        %375 = vmatpush1.msra.mxu0 0.0
        %376 = vmatprep.subr.mxu0 0.0
        %377 = vmatpush1.msra.mxu0 0.0
        %378 = vmatprep.subr.mxu0 0.0
        %379 = vmatpush1.msra.mxu0 0.0
        %380 = vmatprep.subr.mxu0 0.0
        %381 = vmatpush1.msra.mxu0 0.0
        %382 = vmatprep.subr.mxu0 0.0
        %383 = vmatpush1.msra.mxu0 0.0
        %384 = vmatprep.subr.mxu0 0.0
        %385 = vmatpush1.msra.mxu0 0.0
        %386 = vmatprep.subr.mxu0 0.0
        %387 = vmatpush1.msra.mxu0 0.0
        %388 = vmatprep.subr.mxu0 0.0
        %389 = vmatpush1.msra.mxu0 0.0
        %390 = vmatprep.subr.mxu0 0.0
        %391 = vmatpush1.msra.mxu0 0.0
        %392 = vmatprep.subr.mxu0 0.0
        %393 = vmatpush1.msra.mxu0 0.0
        %394 = vmatprep.subr.mxu0 0.0
        %395 = vmatpush1.msra.mxu0 0.0
        %396 = vmatprep.subr.mxu0 0.0
        %397 = vmatpush1.msra.mxu0 0.0
        %398 = vmatprep.subr.mxu0 0.0
        %399 = vmatpush1.msra.mxu0 0.0
        %400 = vmatprep.subr.mxu0 0.0
        %401 = vmatpush1.msra.mxu0 0.0
        %402 = vmatprep.subr.mxu0 0.0
        %403 = vmatpush1.msra.mxu0 0.0
        %404 = vmatprep.subr.mxu0 0.0
        %405 = vmatpush1.msra.mxu0 0.0
        %406 = vmatprep.subr.mxu0 0.0
        %407 = vmatpush1.msra.mxu0 0.0
        %408 = vmatprep.mubr.f32.mxu0 0.0
        %409 = vmatmul.mubr.f32.gmra.mrb[0].mxu0 %v342
        %v410 = vpop.f32.mrb[0].mxu0
        %v411 = vadd.f32 %v338, %v410
        %v412 = vpop.f32.mrb[0].mxu0
        %413 = vdwg.mxu0
        %s414 = scalar_lea.vmem [#allocation8], 32
        %v415 = vld [vmem:[%s414] sm:$0xff]
        %v416 = vld [vmem:[%s414 + $0x8] sm:$0xff]
        %v417 = vld [vmem:[%s414 + $0x10] sm:$0xff]
        %v418 = vld [vmem:[%s414 + $0x18] sm:$0xff]
        %s419 = scalar_lea.vmem %s4, 1
        %v420 = vld [vmem:[%s419] sm:$0x1]
        %v422 = vlaneseq
        %v423 = vshrl.u32 %v422, 7
        %v424 = vsub.s32 0, %v423
        %v425 = vrot.slane %v420, %v424
        %v428 = vsel %vm340, %v327, 0
        %430 = vmatprep.subr.mxu0 0.0
        %431 = vmatpush1.msra.mxu0 %v415
        %432 = vmatprep.subr.mxu0 0.0
        %433 = vmatpush1.msra.mxu0 %v416
        %434 = vmatprep.subr.mxu0 0.0
        %435 = vmatpush1.msra.mxu0 %v417
        %436 = vmatprep.subr.mxu0 0.0
        %437 = vmatpush1.msra.mxu0 %v418
        %438 = vmatprep.subr.mxu0 0.0
        %439 = vmatpush1.msra.mxu0 0.0
        %440 = vmatprep.subr.mxu0 0.0
        %441 = vmatpush1.msra.mxu0 0.0
        %442 = vmatprep.subr.mxu0 0.0
        %443 = vmatpush1.msra.mxu0 0.0
        %444 = vmatprep.subr.mxu0 0.0
        %445 = vmatpush1.msra.mxu0 0.0
        %446 = vmatprep.subr.mxu0 0.0
        %447 = vmatpush1.msra.mxu0 0.0
        %448 = vmatprep.subr.mxu0 0.0
        %449 = vmatpush1.msra.mxu0 0.0
        %450 = vmatprep.subr.mxu0 0.0
        %451 = vmatpush1.msra.mxu0 0.0
        %452 = vmatprep.subr.mxu0 0.0
        %453 = vmatpush1.msra.mxu0 0.0
        %454 = vmatprep.subr.mxu0 0.0
        %455 = vmatpush1.msra.mxu0 0.0
        %456 = vmatprep.subr.mxu0 0.0
        %457 = vmatpush1.msra.mxu0 0.0
        %458 = vmatprep.subr.mxu0 0.0
        %459 = vmatpush1.msra.mxu0 0.0
        %460 = vmatprep.subr.mxu0 0.0
        %461 = vmatpush1.msra.mxu0 0.0
        %462 = vmatprep.subr.mxu0 0.0
        %463 = vmatpush1.msra.mxu0 0.0
        %464 = vmatprep.subr.mxu0 0.0
        %465 = vmatpush1.msra.mxu0 0.0
        %466 = vmatprep.subr.mxu0 0.0
        %467 = vmatpush1.msra.mxu0 0.0
        %468 = vmatprep.subr.mxu0 0.0
        %469 = vmatpush1.msra.mxu0 0.0
        %470 = vmatprep.subr.mxu0 0.0
        %471 = vmatpush1.msra.mxu0 0.0
        %472 = vmatprep.subr.mxu0 0.0
        %473 = vmatpush1.msra.mxu0 0.0
        %474 = vmatprep.subr.mxu0 0.0
        %475 = vmatpush1.msra.mxu0 0.0
        %476 = vmatprep.subr.mxu0 0.0
        %477 = vmatpush1.msra.mxu0 0.0
        %478 = vmatprep.subr.mxu0 0.0
        %479 = vmatpush1.msra.mxu0 0.0
        %480 = vmatprep.subr.mxu0 0.0
        %481 = vmatpush1.msra.mxu0 0.0
        %482 = vmatprep.subr.mxu0 0.0
        %483 = vmatpush1.msra.mxu0 0.0
        %484 = vmatprep.subr.mxu0 0.0
        %485 = vmatpush1.msra.mxu0 0.0
        %486 = vmatprep.subr.mxu0 0.0
        %487 = vmatpush1.msra.mxu0 0.0
        %488 = vmatprep.subr.mxu0 0.0
        %489 = vmatpush1.msra.mxu0 0.0
        %490 = vmatprep.subr.mxu0 0.0
        %491 = vmatpush1.msra.mxu0 0.0
        %492 = vmatprep.subr.mxu0 0.0
        %493 = vmatpush1.msra.mxu0 0.0
        %494 = vmatprep.mubr.f32.mxu0 0.0
        %495 = vmatmul.mubr.f32.gmra.mrb[0].mxu0 %v428
        %v496 = vpop.f32.mrb[0].mxu0
        %v497 = vadd.f32 %v425, %v496
        %v498 = vpop.f32.mrb[0].mxu0
        %499 = vdwg.mxu0
        %s500 = scalar_lea.vmem [#allocation8], 64
        %v501 = vld [vmem:[%s500] sm:$0xff]
        %v502 = vld [vmem:[%s500 + $0x8] sm:$0xff]
        %v503 = vld [vmem:[%s500 + $0x10] sm:$0xff]
        %v504 = vld [vmem:[%s500 + $0x18] sm:$0xff]
        %s505 = scalar_lea.vmem %s4, 2
        %v506 = vld [vmem:[%s505] sm:$0x1]
        %v508 = vlaneseq
        %v509 = vshrl.u32 %v508, 7
        %v510 = vsub.s32 0, %v509
        %v511 = vrot.slane %v506, %v510
        %v514 = vsel %vm340, %v328, 0
        %516 = vmatprep.subr.mxu0 0.0
        %517 = vmatpush1.msra.mxu0 %v501
        %518 = vmatprep.subr.mxu0 0.0
        %519 = vmatpush1.msra.mxu0 %v502
        %520 = vmatprep.subr.mxu0 0.0
        %521 = vmatpush1.msra.mxu0 %v503
        %522 = vmatprep.subr.mxu0 0.0
        %523 = vmatpush1.msra.mxu0 %v504
        %524 = vmatprep.subr.mxu0 0.0
        %525 = vmatpush1.msra.mxu0 0.0
        %526 = vmatprep.subr.mxu0 0.0
        %527 = vmatpush1.msra.mxu0 0.0
        %528 = vmatprep.subr.mxu0 0.0
        %529 = vmatpush1.msra.mxu0 0.0
        %530 = vmatprep.subr.mxu0 0.0
        %531 = vmatpush1.msra.mxu0 0.0
        %532 = vmatprep.subr.mxu0 0.0
        %533 = vmatpush1.msra.mxu0 0.0
        %534 = vmatprep.subr.mxu0 0.0
        %535 = vmatpush1.msra.mxu0 0.0
        %536 = vmatprep.subr.mxu0 0.0
        %537 = vmatpush1.msra.mxu0 0.0
        %538 = vmatprep.subr.mxu0 0.0
        %539 = vmatpush1.msra.mxu0 0.0
        %540 = vmatprep.subr.mxu0 0.0
        %541 = vmatpush1.msra.mxu0 0.0
        %542 = vmatprep.subr.mxu0 0.0
        %543 = vmatpush1.msra.mxu0 0.0
        %544 = vmatprep.subr.mxu0 0.0
        %545 = vmatpush1.msra.mxu0 0.0
        %546 = vmatprep.subr.mxu0 0.0
        %547 = vmatpush1.msra.mxu0 0.0
        %548 = vmatprep.subr.mxu0 0.0
        %549 = vmatpush1.msra.mxu0 0.0
        %550 = vmatprep.subr.mxu0 0.0
        %551 = vmatpush1.msra.mxu0 0.0
        %552 = vmatprep.subr.mxu0 0.0
        %553 = vmatpush1.msra.mxu0 0.0
        %554 = vmatprep.subr.mxu0 0.0
        %555 = vmatpush1.msra.mxu0 0.0
        %556 = vmatprep.subr.mxu0 0.0
        %557 = vmatpush1.msra.mxu0 0.0
        %558 = vmatprep.subr.mxu0 0.0
        %559 = vmatpush1.msra.mxu0 0.0
        %560 = vmatprep.subr.mxu0 0.0
        %561 = vmatpush1.msra.mxu0 0.0
        %562 = vmatprep.subr.mxu0 0.0
        %563 = vmatpush1.msra.mxu0 0.0
        %564 = vmatprep.subr.mxu0 0.0
        %565 = vmatpush1.msra.mxu0 0.0
        %566 = vmatprep.subr.mxu0 0.0
        %567 = vmatpush1.msra.mxu0 0.0
        %568 = vmatprep.subr.mxu0 0.0
        %569 = vmatpush1.msra.mxu0 0.0
        %570 = vmatprep.subr.mxu0 0.0
        %571 = vmatpush1.msra.mxu0 0.0
        %572 = vmatprep.subr.mxu0 0.0
        %573 = vmatpush1.msra.mxu0 0.0
        %574 = vmatprep.subr.mxu0 0.0
        %575 = vmatpush1.msra.mxu0 0.0
        %576 = vmatprep.subr.mxu0 0.0
        %577 = vmatpush1.msra.mxu0 0.0
        %578 = vmatprep.subr.mxu0 0.0
        %579 = vmatpush1.msra.mxu0 0.0
        %580 = vmatprep.mubr.f32.mxu0 0.0
        %581 = vmatmul.mubr.f32.gmra.mrb[0].mxu0 %v514
        %v582 = vpop.f32.mrb[0].mxu0
        %v583 = vadd.f32 %v511, %v582
        %v584 = vpop.f32.mrb[0].mxu0
        %585 = vdwg.mxu0
        %v586 = vmul.f32 %v411, 0.35355338
        %vm587 = vcmask 64512
        %v589 = vsel %vm587, %v586, 0
        %v592 = vsel %vm587, %v497, 0
        %594 = vmatprep.subr.mxu0 0.0
        %595 = vmatpush1.xpose.msra.mxu0 %v592
        %596 = vmatprep.subr.mxu0 0.0
        %597 = vmatpush1.xpose.msra.mxu0 0.0
        %598 = vmatprep.subr.mxu0 0.0
        %599 = vmatpush1.xpose.msra.mxu0 0.0
        %600 = vmatprep.subr.mxu0 0.0
        %601 = vmatpush1.xpose.msra.mxu0 0.0
        %602 = vmatprep.subr.mxu0 0.0
        %603 = vmatpush1.xpose.msra.mxu0 0.0
        %604 = vmatprep.subr.mxu0 0.0
        %605 = vmatpush1.xpose.msra.mxu0 0.0
        %606 = vmatprep.subr.mxu0 0.0
        %607 = vmatpush1.xpose.msra.mxu0 0.0
        %608 = vmatprep.subr.mxu0 0.0
        %609 = vmatpush1.xpose.msra.mxu0 0.0
        %610 = vmatprep.subr.mxu0 0.0
        %611 = vmatpush1.xpose.msra.mxu0 0.0
        %612 = vmatprep.subr.mxu0 0.0
        %613 = vmatpush1.xpose.msra.mxu0 0.0
        %614 = vmatprep.subr.mxu0 0.0
        %615 = vmatpush1.xpose.msra.mxu0 0.0
        %616 = vmatprep.subr.mxu0 0.0
        %617 = vmatpush1.xpose.msra.mxu0 0.0
        %618 = vmatprep.subr.mxu0 0.0
        %619 = vmatpush1.xpose.msra.mxu0 0.0
        %620 = vmatprep.subr.mxu0 0.0
        %621 = vmatpush1.xpose.msra.mxu0 0.0
        %622 = vmatprep.subr.mxu0 0.0
        %623 = vmatpush1.xpose.msra.mxu0 0.0
        %624 = vmatprep.subr.mxu0 0.0
        %625 = vmatpush1.xpose.msra.mxu0 0.0
        %626 = vmatprep.subr.mxu0 0.0
        %627 = vmatpush1.xpose.msra.mxu0 0.0
        %628 = vmatprep.subr.mxu0 0.0
        %629 = vmatpush1.xpose.msra.mxu0 0.0
        %630 = vmatprep.subr.mxu0 0.0
        %631 = vmatpush1.xpose.msra.mxu0 0.0
        %632 = vmatprep.subr.mxu0 0.0
        %633 = vmatpush1.xpose.msra.mxu0 0.0
        %634 = vmatprep.subr.mxu0 0.0
        %635 = vmatpush1.xpose.msra.mxu0 0.0
        %636 = vmatprep.subr.mxu0 0.0
        %637 = vmatpush1.xpose.msra.mxu0 0.0
        %638 = vmatprep.subr.mxu0 0.0
        %639 = vmatpush1.xpose.msra.mxu0 0.0
        %640 = vmatprep.subr.mxu0 0.0
        %641 = vmatpush1.xpose.msra.mxu0 0.0
        %642 = vmatprep.subr.mxu0 0.0
        %643 = vmatpush1.xpose.msra.mxu0 0.0
        %644 = vmatprep.subr.mxu0 0.0
        %645 = vmatpush1.xpose.msra.mxu0 0.0
        %646 = vmatprep.subr.mxu0 0.0
        %647 = vmatpush1.xpose.msra.mxu0 0.0
        %648 = vmatprep.subr.mxu0 0.0
        %649 = vmatpush1.xpose.msra.mxu0 0.0
        %650 = vmatprep.subr.mxu0 0.0
        %651 = vmatpush1.xpose.msra.mxu0 0.0
        %652 = vmatprep.subr.mxu0 0.0
        %653 = vmatpush1.xpose.msra.mxu0 0.0
        %654 = vmatprep.subr.mxu0 0.0
        %655 = vmatpush1.xpose.msra.mxu0 0.0
        %656 = vmatprep.subr.mxu0 0.0
        %657 = vmatpush1.xpose.msra.mxu0 0.0
        %658 = vmatprep.mubr.f32.mxu0 0.0
        %659 = vmatmul.mubr.f32.gmra.mrb[0].mxu0 %v589
        %v660 = vpop.f32.mrb[0].mxu0
        %v661 = vadd.f32 0.0, %v660
        %v662 = vpop.f32.mrb[0].mxu0
        %663 = vdwg.mxu0
        %v664 = vsel %vm587, %v661, -inf
        %665 = vmax.xlane.f32.xlu0 %v664
        %v666 = vpop.xlane.xlu0 %665
        %v667 = vsub.f32 %v661, %v666
        %v668 = vmul.f32 %v667, 1.442695
        %v669 = vpow.pop %v668
        %v670 = vsel %vm587, %v669, 0.0
        %671 = vadd.xlane.f32.xlu0 %v670
        %v672 = vpop.xlane.xlu0 %671
        %v673 = vrcp.pop %v672
        %v674 = vmul.f32 %v669, %v673
        %v676 = vsel %vm587, %v674, 0
        %678 = vmatprep.subr.mxu0 0.0
        %679 = vmatpush1.msra.mxu0 %v583
        %680 = vmatprep.subr.mxu0 0.0
        %681 = vmatpush1.msra.mxu0 0.0
        %682 = vmatprep.subr.mxu0 0.0
        %683 = vmatpush1.msra.mxu0 0.0
        %684 = vmatprep.subr.mxu0 0.0
        %685 = vmatpush1.msra.mxu0 0.0
        %686 = vmatprep.subr.mxu0 0.0
        %687 = vmatpush1.msra.mxu0 0.0
        %688 = vmatprep.subr.mxu0 0.0
        %689 = vmatpush1.msra.mxu0 0.0
        %690 = vmatprep.subr.mxu0 0.0
        %691 = vmatpush1.msra.mxu0 0.0
        %692 = vmatprep.subr.mxu0 0.0
        %693 = vmatpush1.msra.mxu0 0.0
        %694 = vmatprep.subr.mxu0 0.0
        %695 = vmatpush1.msra.mxu0 0.0
        %696 = vmatprep.subr.mxu0 0.0
        %697 = vmatpush1.msra.mxu0 0.0
        %698 = vmatprep.subr.mxu0 0.0
        %699 = vmatpush1.msra.mxu0 0.0
        %700 = vmatprep.subr.mxu0 0.0
        %701 = vmatpush1.msra.mxu0 0.0
        %702 = vmatprep.subr.mxu0 0.0
        %703 = vmatpush1.msra.mxu0 0.0
        %704 = vmatprep.subr.mxu0 0.0
        %705 = vmatpush1.msra.mxu0 0.0
        %706 = vmatprep.subr.mxu0 0.0
        %707 = vmatpush1.msra.mxu0 0.0
        %708 = vmatprep.subr.mxu0 0.0
        %709 = vmatpush1.msra.mxu0 0.0
        %710 = vmatprep.subr.mxu0 0.0
        %711 = vmatpush1.msra.mxu0 0.0
        %712 = vmatprep.subr.mxu0 0.0
        %713 = vmatpush1.msra.mxu0 0.0
        %714 = vmatprep.subr.mxu0 0.0
        %715 = vmatpush1.msra.mxu0 0.0
        %716 = vmatprep.subr.mxu0 0.0
        %717 = vmatpush1.msra.mxu0 0.0
        %718 = vmatprep.subr.mxu0 0.0
        %719 = vmatpush1.msra.mxu0 0.0
        %720 = vmatprep.subr.mxu0 0.0
        %721 = vmatpush1.msra.mxu0 0.0
        %722 = vmatprep.subr.mxu0 0.0
        %723 = vmatpush1.msra.mxu0 0.0
        %724 = vmatprep.subr.mxu0 0.0
        %725 = vmatpush1.msra.mxu0 0.0
        %726 = vmatprep.subr.mxu0 0.0
        %727 = vmatpush1.msra.mxu0 0.0
        %728 = vmatprep.subr.mxu0 0.0
        %729 = vmatpush1.msra.mxu0 0.0
        %730 = vmatprep.subr.mxu0 0.0
        %731 = vmatpush1.msra.mxu0 0.0
        %732 = vmatprep.subr.mxu0 0.0
        %733 = vmatpush1.msra.mxu0 0.0
        %734 = vmatprep.subr.mxu0 0.0
        %735 = vmatpush1.msra.mxu0 0.0
        %736 = vmatprep.subr.mxu0 0.0
        %737 = vmatpush1.msra.mxu0 0.0
        %738 = vmatprep.subr.mxu0 0.0
        %739 = vmatpush1.msra.mxu0 0.0
        %740 = vmatprep.subr.mxu0 0.0
        %741 = vmatpush1.msra.mxu0 0.0
        %742 = vmatprep.mubr.f32.mxu0 0.0
        %743 = vmatmul.mubr.f32.gmra.mrb[0].mxu0 %v676
        %v744 = vpop.f32.mrb[0].mxu0
        %v745 = vadd.f32 0.0, %v744
        %v746 = vpop.f32.mrb[0].mxu0
        %747 = vdwg.mxu0
        %748 = vrot.lane.b32.xlu0 %v586, 120
        %v749 = vpop.permute.xlu0 %748
        %750 = vrot.lane.b32.xlu0 %v497, 120
        %v751 = vpop.permute.xlu0 %750
        %v752 = vsel %vm587, %v749, 0
        %v754 = vsel %vm587, %v751, 0
        %756 = vmatprep.subr.mxu0 0.0
        %757 = vmatpush1.xpose.msra.mxu0 %v754
        %758 = vmatprep.subr.mxu0 0.0
        %759 = vmatpush1.xpose.msra.mxu0 0.0
        %760 = vmatprep.subr.mxu0 0.0
        %761 = vmatpush1.xpose.msra.mxu0 0.0
        %762 = vmatprep.subr.mxu0 0.0
        %763 = vmatpush1.xpose.msra.mxu0 0.0
        %764 = vmatprep.subr.mxu0 0.0
        %765 = vmatpush1.xpose.msra.mxu0 0.0
        %766 = vmatprep.subr.mxu0 0.0
        %767 = vmatpush1.xpose.msra.mxu0 0.0
        %768 = vmatprep.subr.mxu0 0.0
        %769 = vmatpush1.xpose.msra.mxu0 0.0
        %770 = vmatprep.subr.mxu0 0.0
        %771 = vmatpush1.xpose.msra.mxu0 0.0
        %772 = vmatprep.subr.mxu0 0.0
        %773 = vmatpush1.xpose.msra.mxu0 0.0
        %774 = vmatprep.subr.mxu0 0.0
        %775 = vmatpush1.xpose.msra.mxu0 0.0
        %776 = vmatprep.subr.mxu0 0.0
        %777 = vmatpush1.xpose.msra.mxu0 0.0
        %778 = vmatprep.subr.mxu0 0.0
        %779 = vmatpush1.xpose.msra.mxu0 0.0
        %780 = vmatprep.subr.mxu0 0.0
        %781 = vmatpush1.xpose.msra.mxu0 0.0
        %782 = vmatprep.subr.mxu0 0.0
        %783 = vmatpush1.xpose.msra.mxu0 0.0
        %784 = vmatprep.subr.mxu0 0.0
        %785 = vmatpush1.xpose.msra.mxu0 0.0
        %786 = vmatprep.subr.mxu0 0.0
        %787 = vmatpush1.xpose.msra.mxu0 0.0
        %788 = vmatprep.subr.mxu0 0.0
        %789 = vmatpush1.xpose.msra.mxu0 0.0
        %790 = vmatprep.subr.mxu0 0.0
        %791 = vmatpush1.xpose.msra.mxu0 0.0
        %792 = vmatprep.subr.mxu0 0.0
        %793 = vmatpush1.xpose.msra.mxu0 0.0
        %794 = vmatprep.subr.mxu0 0.0
        %795 = vmatpush1.xpose.msra.mxu0 0.0
        %796 = vmatprep.subr.mxu0 0.0
        %797 = vmatpush1.xpose.msra.mxu0 0.0
        %798 = vmatprep.subr.mxu0 0.0
        %799 = vmatpush1.xpose.msra.mxu0 0.0
        %800 = vmatprep.subr.mxu0 0.0
        %801 = vmatpush1.xpose.msra.mxu0 0.0
        %802 = vmatprep.subr.mxu0 0.0
        %803 = vmatpush1.xpose.msra.mxu0 0.0
        %804 = vmatprep.subr.mxu0 0.0
        %805 = vmatpush1.xpose.msra.mxu0 0.0
        %806 = vmatprep.subr.mxu0 0.0
        %807 = vmatpush1.xpose.msra.mxu0 0.0
        %808 = vmatprep.subr.mxu0 0.0
        %809 = vmatpush1.xpose.msra.mxu0 0.0
        %810 = vmatprep.subr.mxu0 0.0
        %811 = vmatpush1.xpose.msra.mxu0 0.0
        %812 = vmatprep.subr.mxu0 0.0
        %813 = vmatpush1.xpose.msra.mxu0 0.0
        %814 = vmatprep.subr.mxu0 0.0
        %815 = vmatpush1.xpose.msra.mxu0 0.0
        %816 = vmatprep.subr.mxu0 0.0
        %817 = vmatpush1.xpose.msra.mxu0 0.0
        %818 = vmatprep.subr.mxu0 0.0
        %819 = vmatpush1.xpose.msra.mxu0 0.0
        %820 = vmatprep.mubr.f32.mxu0 0.0
        %821 = vmatmul.mubr.f32.gmra.mrb[0].mxu0 %v752
        %v822 = vpop.f32.mrb[0].mxu0
        %v823 = vadd.f32 0.0, %v822
        %v824 = vpop.f32.mrb[0].mxu0
        %825 = vdwg.mxu0
        %v826 = vsel %vm587, %v823, -inf
        %827 = vmax.xlane.f32.xlu0 %v826
        %v828 = vpop.xlane.xlu0 %827
        %v829 = vsub.f32 %v823, %v828
        %v830 = vmul.f32 %v829, 1.442695
        %v831 = vpow.pop %v830
        %v832 = vsel %vm587, %v831, 0.0
        %833 = vadd.xlane.f32.xlu0 %v832
        %v834 = vpop.xlane.xlu0 %833
        %v835 = vrcp.pop %v834
        %v836 = vmul.f32 %v831, %v835
        %838 = vrot.lane.b32.xlu0 %v583, 120
        %v839 = vpop.permute.xlu0 %838
        %v842 = vsel %vm587, %v836, 0
        %844 = vmatprep.subr.mxu0 0.0
        %845 = vmatpush1.msra.mxu0 %v839
        %846 = vmatprep.subr.mxu0 0.0
        %847 = vmatpush1.msra.mxu0 0.0
        %848 = vmatprep.subr.mxu0 0.0
        %849 = vmatpush1.msra.mxu0 0.0
        %850 = vmatprep.subr.mxu0 0.0
        %851 = vmatpush1.msra.mxu0 0.0
        %852 = vmatprep.subr.mxu0 0.0
        %853 = vmatpush1.msra.mxu0 0.0
        %854 = vmatprep.subr.mxu0 0.0
        %855 = vmatpush1.msra.mxu0 0.0
        %856 = vmatprep.subr.mxu0 0.0
        %857 = vmatpush1.msra.mxu0 0.0
        %858 = vmatprep.subr.mxu0 0.0
        %859 = vmatpush1.msra.mxu0 0.0
        %860 = vmatprep.subr.mxu0 0.0
        %861 = vmatpush1.msra.mxu0 0.0
        %862 = vmatprep.subr.mxu0 0.0
        %863 = vmatpush1.msra.mxu0 0.0
        %864 = vmatprep.subr.mxu0 0.0
        %865 = vmatpush1.msra.mxu0 0.0
        %866 = vmatprep.subr.mxu0 0.0
        %867 = vmatpush1.msra.mxu0 0.0
        %868 = vmatprep.subr.mxu0 0.0
        %869 = vmatpush1.msra.mxu0 0.0
        %870 = vmatprep.subr.mxu0 0.0
        %871 = vmatpush1.msra.mxu0 0.0
        %872 = vmatprep.subr.mxu0 0.0
        %873 = vmatpush1.msra.mxu0 0.0
        %874 = vmatprep.subr.mxu0 0.0
        %875 = vmatpush1.msra.mxu0 0.0
        %876 = vmatprep.subr.mxu0 0.0
        %877 = vmatpush1.msra.mxu0 0.0
        %878 = vmatprep.subr.mxu0 0.0
        %879 = vmatpush1.msra.mxu0 0.0
        %880 = vmatprep.subr.mxu0 0.0
        %881 = vmatpush1.msra.mxu0 0.0
        %882 = vmatprep.subr.mxu0 0.0
        %883 = vmatpush1.msra.mxu0 0.0
        %884 = vmatprep.subr.mxu0 0.0
        %885 = vmatpush1.msra.mxu0 0.0
        %886 = vmatprep.subr.mxu0 0.0
        %887 = vmatpush1.msra.mxu0 0.0
        %888 = vmatprep.subr.mxu0 0.0
        %889 = vmatpush1.msra.mxu0 0.0
        %890 = vmatprep.subr.mxu0 0.0
        %891 = vmatpush1.msra.mxu0 0.0
        %892 = vmatprep.subr.mxu0 0.0
        %893 = vmatpush1.msra.mxu0 0.0
        %894 = vmatprep.subr.mxu0 0.0
        %895 = vmatpush1.msra.mxu0 0.0
        %896 = vmatprep.subr.mxu0 0.0
        %897 = vmatpush1.msra.mxu0 0.0
        %898 = vmatprep.subr.mxu0 0.0
        %899 = vmatpush1.msra.mxu0 0.0
        %900 = vmatprep.subr.mxu0 0.0
        %901 = vmatpush1.msra.mxu0 0.0
        %902 = vmatprep.subr.mxu0 0.0
        %903 = vmatpush1.msra.mxu0 0.0
        %904 = vmatprep.subr.mxu0 0.0
        %905 = vmatpush1.msra.mxu0 0.0
        %906 = vmatprep.subr.mxu0 0.0
        %907 = vmatpush1.msra.mxu0 0.0
        %908 = vmatprep.mubr.f32.mxu0 0.0
        %909 = vmatmul.mubr.f32.gmra.mrb[0].mxu0 %v842
        %v910 = vpop.f32.mrb[0].mxu0
        %v911 = vadd.f32 0.0, %v910
        %v912 = vpop.f32.mrb[0].mxu0
        %913 = vdwg.mxu0
        %914 = vrot.lane.b32.xlu0 %v586, 112
        %v915 = vpop.permute.xlu0 %914
        %916 = vrot.lane.b32.xlu0 %v497, 112
        %v917 = vpop.permute.xlu0 %916
        %v918 = vsel %vm587, %v915, 0
        %v920 = vsel %vm587, %v917, 0
        %922 = vmatprep.subr.mxu0 0.0
        %923 = vmatpush1.xpose.msra.mxu0 %v920
        %924 = vmatprep.subr.mxu0 0.0
        %925 = vmatpush1.xpose.msra.mxu0 0.0
        %926 = vmatprep.subr.mxu0 0.0
        %927 = vmatpush1.xpose.msra.mxu0 0.0
        %928 = vmatprep.subr.mxu0 0.0
        %929 = vmatpush1.xpose.msra.mxu0 0.0
        %930 = vmatprep.subr.mxu0 0.0
        %931 = vmatpush1.xpose.msra.mxu0 0.0
        %932 = vmatprep.subr.mxu0 0.0
        %933 = vmatpush1.xpose.msra.mxu0 0.0
        %934 = vmatprep.subr.mxu0 0.0
        %935 = vmatpush1.xpose.msra.mxu0 0.0
        %936 = vmatprep.subr.mxu0 0.0
        %937 = vmatpush1.xpose.msra.mxu0 0.0
        %938 = vmatprep.subr.mxu0 0.0
        %939 = vmatpush1.xpose.msra.mxu0 0.0
        %940 = vmatprep.subr.mxu0 0.0
        %941 = vmatpush1.xpose.msra.mxu0 0.0
        %942 = vmatprep.subr.mxu0 0.0
        %943 = vmatpush1.xpose.msra.mxu0 0.0
        %944 = vmatprep.subr.mxu0 0.0
        %945 = vmatpush1.xpose.msra.mxu0 0.0
        %946 = vmatprep.subr.mxu0 0.0
        %947 = vmatpush1.xpose.msra.mxu0 0.0
        %948 = vmatprep.subr.mxu0 0.0
        %949 = vmatpush1.xpose.msra.mxu0 0.0
        %950 = vmatprep.subr.mxu0 0.0
        %951 = vmatpush1.xpose.msra.mxu0 0.0
        %952 = vmatprep.subr.mxu0 0.0
        %953 = vmatpush1.xpose.msra.mxu0 0.0
        %954 = vmatprep.subr.mxu0 0.0
        %955 = vmatpush1.xpose.msra.mxu0 0.0
        %956 = vmatprep.subr.mxu0 0.0
        %957 = vmatpush1.xpose.msra.mxu0 0.0
        %958 = vmatprep.subr.mxu0 0.0
        %959 = vmatpush1.xpose.msra.mxu0 0.0
        %960 = vmatprep.subr.mxu0 0.0
        %961 = vmatpush1.xpose.msra.mxu0 0.0
        %962 = vmatprep.subr.mxu0 0.0
        %963 = vmatpush1.xpose.msra.mxu0 0.0
        %964 = vmatprep.subr.mxu0 0.0
        %965 = vmatpush1.xpose.msra.mxu0 0.0
        %966 = vmatprep.subr.mxu0 0.0
        %967 = vmatpush1.xpose.msra.mxu0 0.0
        %968 = vmatprep.subr.mxu0 0.0
        %969 = vmatpush1.xpose.msra.mxu0 0.0
        %970 = vmatprep.subr.mxu0 0.0
        %971 = vmatpush1.xpose.msra.mxu0 0.0
        %972 = vmatprep.subr.mxu0 0.0
        %973 = vmatpush1.xpose.msra.mxu0 0.0
        %974 = vmatprep.subr.mxu0 0.0
        %975 = vmatpush1.xpose.msra.mxu0 0.0
        %976 = vmatprep.subr.mxu0 0.0
        %977 = vmatpush1.xpose.msra.mxu0 0.0
        %978 = vmatprep.subr.mxu0 0.0
        %979 = vmatpush1.xpose.msra.mxu0 0.0
        %980 = vmatprep.subr.mxu0 0.0
        %981 = vmatpush1.xpose.msra.mxu0 0.0
        %982 = vmatprep.subr.mxu0 0.0
        %983 = vmatpush1.xpose.msra.mxu0 0.0
        %984 = vmatprep.subr.mxu0 0.0
        %985 = vmatpush1.xpose.msra.mxu0 0.0
        %986 = vmatprep.mubr.f32.mxu0 0.0
        %987 = vmatmul.mubr.f32.gmra.mrb[0].mxu0 %v918
        %v988 = vpop.f32.mrb[0].mxu0
        %v989 = vadd.f32 0.0, %v988
        %v990 = vpop.f32.mrb[0].mxu0
        %991 = vdwg.mxu0
        %v992 = vsel %vm587, %v989, -inf
        %993 = vmax.xlane.f32.xlu0 %v992
        %v994 = vpop.xlane.xlu0 %993
        %v995 = vsub.f32 %v989, %v994
        %v996 = vmul.f32 %v995, 1.442695
        %v997 = vpow.pop %v996
        %v998 = vsel %vm587, %v997, 0.0
        %999 = vadd.xlane.f32.xlu0 %v998
        %v1000 = vpop.xlane.xlu0 %999
        %v1001 = vrcp.pop %v1000
        %v1002 = vmul.f32 %v997, %v1001
        %1003 = vrot.lane.b32.xlu0 %v583, 112
        %v1004 = vpop.permute.xlu0 %1003
        %v1007 = vsel %vm587, %v1002, 0
        %1009 = vmatprep.subr.mxu0 0.0
        %1010 = vmatpush1.msra.mxu0 %v1004
        %1011 = vmatprep.subr.mxu0 0.0
        %1012 = vmatpush1.msra.mxu0 0.0
        %1013 = vmatprep.subr.mxu0 0.0
        %1014 = vmatpush1.msra.mxu0 0.0
        %1015 = vmatprep.subr.mxu0 0.0
        %1016 = vmatpush1.msra.mxu0 0.0
        %1017 = vmatprep.subr.mxu0 0.0
        %1018 = vmatpush1.msra.mxu0 0.0
        %1019 = vmatprep.subr.mxu0 0.0
        %1020 = vmatpush1.msra.mxu0 0.0
        %1021 = vmatprep.subr.mxu0 0.0
        %1022 = vmatpush1.msra.mxu0 0.0
        %1023 = vmatprep.subr.mxu0 0.0
        %1024 = vmatpush1.msra.mxu0 0.0
        %1025 = vmatprep.subr.mxu0 0.0
        %1026 = vmatpush1.msra.mxu0 0.0
        %1027 = vmatprep.subr.mxu0 0.0
        %1028 = vmatpush1.msra.mxu0 0.0
        %1029 = vmatprep.subr.mxu0 0.0
        %1030 = vmatpush1.msra.mxu0 0.0
        %1031 = vmatprep.subr.mxu0 0.0
        %1032 = vmatpush1.msra.mxu0 0.0
        %1033 = vmatprep.subr.mxu0 0.0
        %1034 = vmatpush1.msra.mxu0 0.0
        %1035 = vmatprep.subr.mxu0 0.0
        %1036 = vmatpush1.msra.mxu0 0.0
        %1037 = vmatprep.subr.mxu0 0.0
        %1038 = vmatpush1.msra.mxu0 0.0
        %1039 = vmatprep.subr.mxu0 0.0
        %1040 = vmatpush1.msra.mxu0 0.0
        %1041 = vmatprep.subr.mxu0 0.0
        %1042 = vmatpush1.msra.mxu0 0.0
        %1043 = vmatprep.subr.mxu0 0.0
        %1044 = vmatpush1.msra.mxu0 0.0
        %1045 = vmatprep.subr.mxu0 0.0
        %1046 = vmatpush1.msra.mxu0 0.0
        %1047 = vmatprep.subr.mxu0 0.0
        %1048 = vmatpush1.msra.mxu0 0.0
        %1049 = vmatprep.subr.mxu0 0.0
        %1050 = vmatpush1.msra.mxu0 0.0
        %1051 = vmatprep.subr.mxu0 0.0
        %1052 = vmatpush1.msra.mxu0 0.0
        %1053 = vmatprep.subr.mxu0 0.0
        %1054 = vmatpush1.msra.mxu0 0.0
        %1055 = vmatprep.subr.mxu0 0.0
        %1056 = vmatpush1.msra.mxu0 0.0
        %1057 = vmatprep.subr.mxu0 0.0
        %1058 = vmatpush1.msra.mxu0 0.0
        %1059 = vmatprep.subr.mxu0 0.0
        %1060 = vmatpush1.msra.mxu0 0.0
        %1061 = vmatprep.subr.mxu0 0.0
        %1062 = vmatpush1.msra.mxu0 0.0
        %1063 = vmatprep.subr.mxu0 0.0
        %1064 = vmatpush1.msra.mxu0 0.0
        %1065 = vmatprep.subr.mxu0 0.0
        %1066 = vmatpush1.msra.mxu0 0.0
        %1067 = vmatprep.subr.mxu0 0.0
        %1068 = vmatpush1.msra.mxu0 0.0
        %1069 = vmatprep.subr.mxu0 0.0
        %1070 = vmatpush1.msra.mxu0 0.0
        %1071 = vmatprep.subr.mxu0 0.0
        %1072 = vmatpush1.msra.mxu0 0.0
        %1073 = vmatprep.mubr.f32.mxu0 0.0
        %1074 = vmatmul.mubr.f32.gmra.mrb[0].mxu0 %v1007
        %v1075 = vpop.f32.mrb[0].mxu0
        %v1076 = vadd.f32 0.0, %v1075
        %v1077 = vpop.f32.mrb[0].mxu0
        %1078 = vdwg.mxu0
        %1079 = vrot.lane.b32.xlu0 %v586, 104
        %v1080 = vpop.permute.xlu0 %1079
        %1081 = vrot.lane.b32.xlu0 %v497, 104
        %v1082 = vpop.permute.xlu0 %1081
        %v1083 = vsel %vm587, %v1080, 0
        %v1085 = vsel %vm587, %v1082, 0
        %1087 = vmatprep.subr.mxu0 0.0
        %1088 = vmatpush1.xpose.msra.mxu0 %v1085
        %1089 = vmatprep.subr.mxu0 0.0
        %1090 = vmatpush1.xpose.msra.mxu0 0.0
        %1091 = vmatprep.subr.mxu0 0.0
        %1092 = vmatpush1.xpose.msra.mxu0 0.0
        %1093 = vmatprep.subr.mxu0 0.0
        %1094 = vmatpush1.xpose.msra.mxu0 0.0
        %1095 = vmatprep.subr.mxu0 0.0
        %1096 = vmatpush1.xpose.msra.mxu0 0.0
        %1097 = vmatprep.subr.mxu0 0.0
        %1098 = vmatpush1.xpose.msra.mxu0 0.0
        %1099 = vmatprep.subr.mxu0 0.0
        %1100 = vmatpush1.xpose.msra.mxu0 0.0
        %1101 = vmatprep.subr.mxu0 0.0
        %1102 = vmatpush1.xpose.msra.mxu0 0.0
        %1103 = vmatprep.subr.mxu0 0.0
        %1104 = vmatpush1.xpose.msra.mxu0 0.0
        %1105 = vmatprep.subr.mxu0 0.0
        %1106 = vmatpush1.xpose.msra.mxu0 0.0
        %1107 = vmatprep.subr.mxu0 0.0
        %1108 = vmatpush1.xpose.msra.mxu0 0.0
        %1109 = vmatprep.subr.mxu0 0.0
        %1110 = vmatpush1.xpose.msra.mxu0 0.0
        %1111 = vmatprep.subr.mxu0 0.0
        %1112 = vmatpush1.xpose.msra.mxu0 0.0
        %1113 = vmatprep.subr.mxu0 0.0
        %1114 = vmatpush1.xpose.msra.mxu0 0.0
        %1115 = vmatprep.subr.mxu0 0.0
        %1116 = vmatpush1.xpose.msra.mxu0 0.0
        %1117 = vmatprep.subr.mxu0 0.0
        %1118 = vmatpush1.xpose.msra.mxu0 0.0
        %1119 = vmatprep.subr.mxu0 0.0
        %1120 = vmatpush1.xpose.msra.mxu0 0.0
        %1121 = vmatprep.subr.mxu0 0.0
        %1122 = vmatpush1.xpose.msra.mxu0 0.0
        %1123 = vmatprep.subr.mxu0 0.0
        %1124 = vmatpush1.xpose.msra.mxu0 0.0
        %1125 = vmatprep.subr.mxu0 0.0
        %1126 = vmatpush1.xpose.msra.mxu0 0.0
        %1127 = vmatprep.subr.mxu0 0.0
        %1128 = vmatpush1.xpose.msra.mxu0 0.0
        %1129 = vmatprep.subr.mxu0 0.0
        %1130 = vmatpush1.xpose.msra.mxu0 0.0
        %1131 = vmatprep.subr.mxu0 0.0
        %1132 = vmatpush1.xpose.msra.mxu0 0.0
        %1133 = vmatprep.subr.mxu0 0.0
        %1134 = vmatpush1.xpose.msra.mxu0 0.0
        %1135 = vmatprep.subr.mxu0 0.0
        %1136 = vmatpush1.xpose.msra.mxu0 0.0
        %1137 = vmatprep.subr.mxu0 0.0
        %1138 = vmatpush1.xpose.msra.mxu0 0.0
        %1139 = vmatprep.subr.mxu0 0.0
        %1140 = vmatpush1.xpose.msra.mxu0 0.0
        %1141 = vmatprep.subr.mxu0 0.0
        %1142 = vmatpush1.xpose.msra.mxu0 0.0
        %1143 = vmatprep.subr.mxu0 0.0
        %1144 = vmatpush1.xpose.msra.mxu0 0.0
        %1145 = vmatprep.subr.mxu0 0.0
        %1146 = vmatpush1.xpose.msra.mxu0 0.0
        %1147 = vmatprep.subr.mxu0 0.0
        %1148 = vmatpush1.xpose.msra.mxu0 0.0
        %1149 = vmatprep.subr.mxu0 0.0
        %1150 = vmatpush1.xpose.msra.mxu0 0.0
        %1151 = vmatprep.mubr.f32.mxu0 0.0
        %1152 = vmatmul.mubr.f32.gmra.mrb[0].mxu0 %v1083
        %v1153 = vpop.f32.mrb[0].mxu0
        %v1154 = vadd.f32 0.0, %v1153
        %v1155 = vpop.f32.mrb[0].mxu0
        %1156 = vdwg.mxu0
        %v1157 = vsel %vm587, %v1154, -inf
        %1158 = vmax.xlane.f32.xlu0 %v1157
        %v1159 = vpop.xlane.xlu0 %1158
        %v1160 = vsub.f32 %v1154, %v1159
        %v1161 = vmul.f32 %v1160, 1.442695
        %v1162 = vpow.pop %v1161
        %v1163 = vsel %vm587, %v1162, 0.0
        %1164 = vadd.xlane.f32.xlu0 %v1163
        %v1165 = vpop.xlane.xlu0 %1164
        %v1166 = vrcp.pop %v1165
        %v1167 = vmul.f32 %v1162, %v1166
        %1168 = vrot.lane.b32.xlu0 %v583, 104
        %v1169 = vpop.permute.xlu0 %1168
        %v1172 = vsel %vm587, %v1167, 0
        %1174 = vmatprep.subr.mxu0 0.0
        %1175 = vmatpush1.msra.mxu0 %v1169
        %1176 = vmatprep.subr.mxu0 0.0
        %1177 = vmatpush1.msra.mxu0 0.0
        %1178 = vmatprep.subr.mxu0 0.0
        %1179 = vmatpush1.msra.mxu0 0.0
        %1180 = vmatprep.subr.mxu0 0.0
        %1181 = vmatpush1.msra.mxu0 0.0
        %1182 = vmatprep.subr.mxu0 0.0
        %1183 = vmatpush1.msra.mxu0 0.0
        %1184 = vmatprep.subr.mxu0 0.0
        %1185 = vmatpush1.msra.mxu0 0.0
        %1186 = vmatprep.subr.mxu0 0.0
        %1187 = vmatpush1.msra.mxu0 0.0
        %1188 = vmatprep.subr.mxu0 0.0
        %1189 = vmatpush1.msra.mxu0 0.0
        %1190 = vmatprep.subr.mxu0 0.0
        %1191 = vmatpush1.msra.mxu0 0.0
        %1192 = vmatprep.subr.mxu0 0.0
        %1193 = vmatpush1.msra.mxu0 0.0
        %1194 = vmatprep.subr.mxu0 0.0
        %1195 = vmatpush1.msra.mxu0 0.0
        %1196 = vmatprep.subr.mxu0 0.0
        %1197 = vmatpush1.msra.mxu0 0.0
        %1198 = vmatprep.subr.mxu0 0.0
        %1199 = vmatpush1.msra.mxu0 0.0
        %1200 = vmatprep.subr.mxu0 0.0
        %1201 = vmatpush1.msra.mxu0 0.0
        %1202 = vmatprep.subr.mxu0 0.0
        %1203 = vmatpush1.msra.mxu0 0.0
        %1204 = vmatprep.subr.mxu0 0.0
        %1205 = vmatpush1.msra.mxu0 0.0
        %1206 = vmatprep.subr.mxu0 0.0
        %1207 = vmatpush1.msra.mxu0 0.0
        %1208 = vmatprep.subr.mxu0 0.0
        %1209 = vmatpush1.msra.mxu0 0.0
        %1210 = vmatprep.subr.mxu0 0.0
        %1211 = vmatpush1.msra.mxu0 0.0
        %1212 = vmatprep.subr.mxu0 0.0
        %1213 = vmatpush1.msra.mxu0 0.0
        %1214 = vmatprep.subr.mxu0 0.0
        %1215 = vmatpush1.msra.mxu0 0.0
        %1216 = vmatprep.subr.mxu0 0.0
        %1217 = vmatpush1.msra.mxu0 0.0
        %1218 = vmatprep.subr.mxu0 0.0
        %1219 = vmatpush1.msra.mxu0 0.0
        %1220 = vmatprep.subr.mxu0 0.0
        %1221 = vmatpush1.msra.mxu0 0.0
        %1222 = vmatprep.subr.mxu0 0.0
        %1223 = vmatpush1.msra.mxu0 0.0
        %1224 = vmatprep.subr.mxu0 0.0
        %1225 = vmatpush1.msra.mxu0 0.0
        %1226 = vmatprep.subr.mxu0 0.0
        %1227 = vmatpush1.msra.mxu0 0.0
        %1228 = vmatprep.subr.mxu0 0.0
        %1229 = vmatpush1.msra.mxu0 0.0
        %1230 = vmatprep.subr.mxu0 0.0
        %1231 = vmatpush1.msra.mxu0 0.0
        %1232 = vmatprep.subr.mxu0 0.0
        %1233 = vmatpush1.msra.mxu0 0.0
        %1234 = vmatprep.subr.mxu0 0.0
        %1235 = vmatpush1.msra.mxu0 0.0
        %1236 = vmatprep.subr.mxu0 0.0
        %1237 = vmatpush1.msra.mxu0 0.0
        %1238 = vmatprep.mubr.f32.mxu0 0.0
        %1239 = vmatmul.mubr.f32.gmra.mrb[0].mxu0 %v1172
        %v1240 = vpop.f32.mrb[0].mxu0
        %v1241 = vadd.f32 0.0, %v1240
        %v1242 = vpop.f32.mrb[0].mxu0
        %1243 = vdwg.mxu0
        %1245 = vrot.lane.b32.xlu0 %v911, 8
        %v1246 = vpop.permute.xlu0 %1245
        %1249 = vrot.lane.b32.xlu0 %v1076, 16
        %v1250 = vpop.permute.xlu0 %1249
        %1253 = vrot.lane.b32.xlu0 %v1241, 24
        %v1254 = vpop.permute.xlu0 %1253
        %v1256 = vsel %vm587, %v745, %v1246
        %vm1257 = vcmask 130048
        %v1258 = vsel %vm1257, %v1256, %v1250
        %vm1259 = vcmask 195584
        %v1260 = vsel %vm1259, %v1258, %v1254
        %s1261 = scalar_lea.vmem [#allocation8], 96
        %v1262 = vld [vmem:[%s1261] sm:$0xff]
        %v1263 = vld [vmem:[%s1261 + $0x8] sm:$0xff]
        %v1264 = vld [vmem:[%s1261 + $0x10] sm:$0xff]
        %v1265 = vld [vmem:[%s1261 + $0x18] sm:$0xff]
        %s1266 = scalar_lea.vmem %s4, 3
        %v1267 = vld [vmem:[%s1266] sm:$0x1]
        %v1269 = vlaneseq
        %v1270 = vshrl.u32 %v1269, 7
        %v1271 = vsub.s32 0, %v1270
        %v1272 = vrot.slane %v1267, %v1271
        %v1275 = vsel %vm340, %v1260, 0
        %1277 = vmatprep.subr.mxu0 0.0
        %1278 = vmatpush1.msra.mxu0 %v1262
        %1279 = vmatprep.subr.mxu0 0.0
        %1280 = vmatpush1.msra.mxu0 %v1263
        %1281 = vmatprep.subr.mxu0 0.0
        %1282 = vmatpush1.msra.mxu0 %v1264
        %1283 = vmatprep.subr.mxu0 0.0
        %1284 = vmatpush1.msra.mxu0 %v1265
        %1285 = vmatprep.subr.mxu0 0.0
        %1286 = vmatpush1.msra.mxu0 0.0
        %1287 = vmatprep.subr.mxu0 0.0
        %1288 = vmatpush1.msra.mxu0 0.0
        %1289 = vmatprep.subr.mxu0 0.0
        %1290 = vmatpush1.msra.mxu0 0.0
        %1291 = vmatprep.subr.mxu0 0.0
        %1292 = vmatpush1.msra.mxu0 0.0
        %1293 = vmatprep.subr.mxu0 0.0
        %1294 = vmatpush1.msra.mxu0 0.0
        %1295 = vmatprep.subr.mxu0 0.0
        %1296 = vmatpush1.msra.mxu0 0.0
        %1297 = vmatprep.subr.mxu0 0.0
        %1298 = vmatpush1.msra.mxu0 0.0
        %1299 = vmatprep.subr.mxu0 0.0
        %1300 = vmatpush1.msra.mxu0 0.0
        %1301 = vmatprep.subr.mxu0 0.0
        %1302 = vmatpush1.msra.mxu0 0.0
        %1303 = vmatprep.subr.mxu0 0.0
        %1304 = vmatpush1.msra.mxu0 0.0
        %1305 = vmatprep.subr.mxu0 0.0
        %1306 = vmatpush1.msra.mxu0 0.0
        %1307 = vmatprep.subr.mxu0 0.0
        %1308 = vmatpush1.msra.mxu0 0.0
        %1309 = vmatprep.subr.mxu0 0.0
        %1310 = vmatpush1.msra.mxu0 0.0
        %1311 = vmatprep.subr.mxu0 0.0
        %1312 = vmatpush1.msra.mxu0 0.0
        %1313 = vmatprep.subr.mxu0 0.0
        %1314 = vmatpush1.msra.mxu0 0.0
        %1315 = vmatprep.subr.mxu0 0.0
        %1316 = vmatpush1.msra.mxu0 0.0
        %1317 = vmatprep.subr.mxu0 0.0
        %1318 = vmatpush1.msra.mxu0 0.0
        %1319 = vmatprep.subr.mxu0 0.0
        %1320 = vmatpush1.msra.mxu0 0.0
        %1321 = vmatprep.subr.mxu0 0.0
        %1322 = vmatpush1.msra.mxu0 0.0
        %1323 = vmatprep.subr.mxu0 0.0
        %1324 = vmatpush1.msra.mxu0 0.0
        %1325 = vmatprep.subr.mxu0 0.0
        %1326 = vmatpush1.msra.mxu0 0.0
        %1327 = vmatprep.subr.mxu0 0.0
        %1328 = vmatpush1.msra.mxu0 0.0
        %1329 = vmatprep.subr.mxu0 0.0
        %1330 = vmatpush1.msra.mxu0 0.0
        %1331 = vmatprep.subr.mxu0 0.0
        %1332 = vmatpush1.msra.mxu0 0.0
        %1333 = vmatprep.subr.mxu0 0.0
        %1334 = vmatpush1.msra.mxu0 0.0
        %1335 = vmatprep.subr.mxu0 0.0
        %1336 = vmatpush1.msra.mxu0 0.0
        %1337 = vmatprep.subr.mxu0 0.0
        %1338 = vmatpush1.msra.mxu0 0.0
        %1339 = vmatprep.subr.mxu0 0.0
        %1340 = vmatpush1.msra.mxu0 0.0
        %1341 = vmatprep.mubr.f32.mxu0 0.0
        %1342 = vmatmul.mubr.f32.gmra.mrb[0].mxu0 %v1275
        %v1343 = vpop.f32.mrb[0].mxu0
        %v1344 = vadd.f32 %v1272, %v1343
        %v1345 = vpop.f32.mrb[0].mxu0
        %1346 = vdwg.mxu0
        %1347 = vst.msk [vmem:[%s325] sm:$0xff] %vm340, %v1344
        %s1348 = sand.u32 %s154, 1
        %s1349 = scalar_lea.sflag [#allocation4], %s1348
        %s1350 = sand.u32 %s154, 1
        %s1351 = smul.addr %s1350, 8
        %s1352 = scalar_lea.vmem [#allocation10], %s1351
        // Predicated region
        $region57: #{tpu_custom_call.1} parent=39 // pred_check
          %p1353 = pneg %p164
        $region58: #{tpu_custom_call.1} parent=39 // pred_check_branch
          %1355 = sbr.rel (%p1353) target = $region60
        $region59: #{tpu_custom_call.1} parent=39 // pred_region
          %s1357 = ssub.s32 128, 128
          %1358 = vsyncadd %s1349, %s1357
          %s1359 = smul.addr %s26, 128
          %s1360 = scalar_lea.hbm %s5, %s1359
          %s1362 = sshll.u32 %s1352, 4
          %s1363 = int_to_ptr.vmem [resolvable:$true] %s1362
          %1365 = dma.vmem_to_hbm [thread:$0]  %s1363, 128, %s1360, %s1349
        $region60: #{tpu_custom_call.1} parent=39 // pred_fallthru
          _
      $region40: #{tpu_custom_call.1} parent=5 // pred_fallthru
        _
      %p1366 = scmp.le.s32.totalorder 2, %s21
      // Predicated region
      $region61: #{tpu_custom_call.1} parent=5 // pred_check
        %p1367 = pneg %p1366
      $region62: #{tpu_custom_call.1} parent=5 // pred_check_branch
        %1369 = sbr.rel (%p1367) target = $region64
      $region63: #{tpu_custom_call.1} parent=5 // pred_region
        %s1370 = ssub.s32 %s21, 2
        // Predicated region
        $region65: #{tpu_custom_call.1} parent=63 // pred_check
          %p1371 = pneg %p170
        $region66: #{tpu_custom_call.1} parent=63 // pred_check_branch
          %1373 = sbr.rel (%p1371) target = $region68
        $region67: #{tpu_custom_call.1} parent=63 // pred_region
          %s1374 = sand.u32 %s155, 1
          %s1375 = scalar_lea.sflag [#allocation4], %s1374
          %s1376 = sand.u32 %s155, 1
          %s1377 = smul.addr %s1376, 8
          %s1378 = scalar_lea.vmem [#allocation10], %s1377
          %1379 = dma.done %s1375, 128
        $region68: #{tpu_custom_call.1} parent=63 // pred_fallthru
          _
      $region64: #{tpu_custom_call.1} parent=5 // pred_fallthru
        _
    $region6: #{tpu_custom_call.1} parent=1 // loop_footer
      %s25 = sadd.s32 1, %s21
    $region7: #{tpu_custom_call.1} parent=1 // loop_footer_branch
      %20 = sbr.rel target = $region3
    $region8: #{tpu_custom_call.1} parent=1 // loop_exit
      _
    %1380 = vsyncpa [#allocation3], 1
    %s1381 = scalar_lea.sflag [#allocation3], 1
    %1382 = vsyncpa %s1381, 1
    %1383 = vsyncpa [#allocation6], 1
    %s1384 = scalar_lea.sflag [#allocation6], 1
    %1385 = vsyncpa %s1384, 1
    %1386 = vsyncpa [#allocation9], 1
    %1387 = vsyncpa [#allocation4], 1
    %s1388 = scalar_lea.sflag [#allocation4], 1
    %1389 = vsyncpa %s1388, 1

</llo_original>
